<compile_context>
chip_gen: v7x
topology: tpu7x:2x2x1
jax: 0.10.0
libtpu: 0.0.40
codegen_flags: <defaults>
</compile_context>

<pallas_src>
import functools

import jax
import jax.numpy as jnp
from jax import lax
from jax.experimental import pallas as pl
from jax.experimental.pallas import tpu as pltpu


def _moa_kernel(x_ref, w_ref, b_ref, out_ref, attn_ref, qkv_ref, o_acc_ref, *,
                num_heads, head_dim, dim):
    """One grid step == one batch element.

    x_ref:     (1, L, D)   input block
    w_ref:     (D, 3D)     fused pre-transposed [Wq^T*scale | Wk^T | Wv^T]
    b_ref:     (1, 3D)     fused bias           [bq*scale   | bk   | bv  ]
    out_ref:   (1, L, D)   output block
    attn_ref:  (1, H, L, L) attention block
    qkv_ref:   (L, 3D) f32 VMEM scratch — fused projections
    o_acc_ref: (L, D)  f32 VMEM scratch — heads assembled here, stored once
    """
    x = x_ref[0].astype(jnp.float32)                                   # (L, D)

    # Single fused, lane-dense QKV projection (one MXU pass, N = 3*D).
    qkv_ref[...] = (
        jnp.dot(x, w_ref[...], preferred_element_type=jnp.float32) + b_ref[...])

    # Static loop over heads: num_heads is small & static; operands are re-read
    # from VMEM scratch with static lane slices so only the (L, L) score tile is
    # a large live value per iteration.
    for h in range(num_heads):
        lo = h * head_dim
        q = qkv_ref[:, lo:lo + head_dim]                   # (L, hd), pre-scaled
        k = qkv_ref[:, dim + lo:dim + lo + head_dim]       # (L, hd)
        v = qkv_ref[:, 2 * dim + lo:2 * dim + lo + head_dim]

        # q @ k^T without an explicit transpose: contract the last dims.
        s = lax.dot_general(q, k, (((1,), (1,)), ((), ())),
                            preferred_element_type=jnp.float32)        # (L, L)

        # Numerically-stable softmax; denominator reciprocal on the EUP.
        m = jnp.max(s, axis=-1, keepdims=True)
        e = jnp.exp(s - m)
        attn = e * pl.reciprocal(jnp.sum(e, axis=-1, keepdims=True), approx=True)

        attn_ref[0, h] = attn.astype(attn_ref.dtype)       # lane-dense (L wide)
        # Stage this head's output in scratch (unmasked when head_dim % 128 == 0).
        o_acc_ref[:, lo:lo + head_dim] = jnp.dot(
            attn, v, preferred_element_type=jnp.float32)

    # Single full-width (L, D) lane-dense store to the output block.
    out_ref[0] = o_acc_ref[...].astype(out_ref.dtype)


def _build_call(b, l, dim, num_heads, dtype, *, single_buffer_weights):
    head_dim = dim // num_heads
    kernel = functools.partial(
        _moa_kernel, num_heads=num_heads, head_dim=head_dim, dim=dim)

    # Weights/bias have a constant block index across the batch grid -> single
    # buffer them so the fused (D, 3D) f32 weight is not held twice in VMEM.
    const_kw = {}
    if single_buffer_weights:
        const_kw = dict(pipeline_mode=pl.Buffered(1))
    w_spec = pl.BlockSpec((dim, 3 * dim), lambda i: (0, 0), **const_kw)
    b_spec = pl.BlockSpec((1, 3 * dim), lambda i: (0, 0), **const_kw)

    flops = b * (6 * l * dim * dim + 4 * l * l * dim)
    transcendentals = b * num_heads * l * l
    bytes_accessed = 4 * (2 * b * l * dim + 3 * dim * dim + 3 * dim
                          + b * num_heads * l * l)

    return pl.pallas_call(
        kernel,
        out_shape=(
            jax.ShapeDtypeStruct((b, l, dim), dtype),
            jax.ShapeDtypeStruct((b, num_heads, l, l), dtype),
        ),
        grid_spec=pltpu.PrefetchScalarGridSpec(
            num_scalar_prefetch=0,
            grid=(b,),
            in_specs=[
                pl.BlockSpec((1, l, dim), lambda i: (i, 0, 0)),   # x
                w_spec,                                           # fused W^T
                b_spec,                                           # fused bias
            ],
            out_specs=[
                pl.BlockSpec((1, l, dim), lambda i: (i, 0, 0)),
                pl.BlockSpec((1, num_heads, l, l), lambda i: (i, 0, 0, 0)),
            ],
            scratch_shapes=[
                pltpu.VMEM((l, 3 * dim), jnp.float32),   # fused q|k|v
                pltpu.VMEM((l, dim), jnp.float32),       # assembled output
            ],
        ),
        compiler_params=pltpu.CompilerParams(
            dimension_semantics=("parallel",),
            vmem_limit_bytes=32 * 1024 * 1024,
        ),
        cost_estimate=pl.CostEstimate(
            flops=flops,
            transcendentals=transcendentals,
            bytes_accessed=bytes_accessed),
    )


def multi_order_head_attention(x, wq, bq, wk, bk, wv, bv, num_heads):
    """Returns (out, attn) matching MultiOrderHeadAttention.forward (eval mode).

    x:  (B, L, D) float32
    w*: (D, D)    nn.Linear weights (y = x @ W.T + b)
    b*: (D,)
    out:  (B, L, D);  attn: (B, H, L, L)
    """
    b, l, dim = x.shape
    assert dim % num_heads == 0
    scale = float(dim) ** (-0.5)            # full-dim scaling, as in the module

    # Host-side prep (layout plumbing, once per call): pre-transpose, fuse Q/K/V
    # into a single (D, 3D) operand, and fold the softmax scale into Q.
    w_qkv = jnp.concatenate(
        [wq.T * scale, wk.T, wv.T], axis=1).astype(jnp.float32)        # (D, 3D)
    b_qkv = jnp.concatenate(
        [bq * scale, bk, bv]).reshape(1, 3 * dim).astype(jnp.float32)  # (1, 3D)

    # Try the single-buffered-weight variant first; fall back transparently if
    # this JAX build rejects pipeline_mode=pl.Buffered(1).
    last_err = None
    for single_buffer in (True, False):
        try:
            call = _build_call(b, l, dim, num_heads, x.dtype,
                               single_buffer_weights=single_buffer)
            return call(x, w_qkv, b_qkv)
        except Exception as err:  # noqa: BLE001 — intentional graceful fallback
            last_err = err
    raise last_err


def _reference(x, wq, bq, wk, bk, wv, bv, num_heads):
    """Pure-JAX reference reproducing the PyTorch forward exactly."""
    b, l, dim = x.shape
    hd = dim // num_heads
    scale = float(dim) ** (-0.5)

    def lin(t, w, bias):
        return jnp.einsum('bld,ed->ble', t, w) + bias

    q = lin(x, wq, bq)
    k = lin(x, wk, bk)
    v = lin(x, wv, bv)

    def split(t):
        # permute(2,0,1).view(h, hd, b, l).permute(2,0,3,1) == (b, h, l, hd)
        return t.reshape(b, l, num_heads, hd).transpose(0, 2, 1, 3)

    q, k, v = split(q), split(k), split(v)
    dots = jnp.einsum('bhid,bhjd->bhij', q, k) * scale
    attn = jax.nn.softmax(dots, axis=-1)
    o = jnp.einsum('bhij,bhjd->bhid', attn, v)
    o = o.transpose(0, 2, 1, 3).reshape(b, l, dim)
    return o, attn


if __name__ == "__main__":
    B, L, DIM, HEADS = 2, 8, 32, 4

    key = jax.random.PRNGKey(0)
    kx, kq, kk, kv = jax.random.split(key, 4)

    x = jax.random.normal(kx, (B, L, DIM), dtype=jnp.float32)

    # Deterministic xavier_uniform init for (DIM, DIM) linear weights; zero biases.
    bound = (6.0 / (DIM + DIM)) ** 0.5
    wq = jax.random.uniform(kq, (DIM, DIM), jnp.float32, -bound, bound)
    wk = jax.random.uniform(kk, (DIM, DIM), jnp.float32, -bound, bound)
    wv = jax.random.uniform(kv, (DIM, DIM), jnp.float32, -bound, bound)
    bq = jnp.zeros((DIM,), jnp.float32)
    bk = jnp.zeros((DIM,), jnp.float32)
    bv = jnp.zeros((DIM,), jnp.float32)

    out, attn = multi_order_head_attention(x, wq, bq, wk, bk, wv, bv, HEADS)
    out = jax.block_until_ready(out)
    attn = jax.block_until_ready(attn)

    ref_out, ref_attn = _reference(x, wq, bq, wk, bk, wv, bv, HEADS)
    assert out.shape == (B, L, DIM) and attn.shape == (B, HEADS, L, L)
    # Tolerance relaxed from 1e-5 solely because the softmax denominator uses the
    # EUP approximate reciprocal (per the perf feedback); removing approx=True in
    # the kernel restores 1e-5 parity with the reference.
    assert jnp.allclose(out, ref_out, atol=1e-2, rtol=1e-2), \
        float(jnp.max(jnp.abs(out - ref_out)))
    assert jnp.allclose(attn, ref_attn, atol=1e-2, rtol=1e-2), \
        float(jnp.max(jnp.abs(attn - ref_attn)))

    print("KERNEL_OK")
</pallas_src>

<mosaic_0001>
module attributes {stable_mosaic.version = 11 : i64} {
  func.func @_moa_kernel(%arg0: i32, %arg1: memref<1x8x32xf32, #tpu.memory_space<vmem>>, %arg2: memref<32x96xf32, #tpu.memory_space<vmem>>, %arg3: memref<1x96xf32, #tpu.memory_space<vmem>>, %arg4: memref<1x8x32xf32, #tpu.memory_space<vmem>>, %arg5: memref<1x4x8x8xf32, #tpu.memory_space<vmem>>, %arg6: memref<8x96xf32, #tpu.memory_space<vmem>>, %arg7: memref<8x32xf32, #tpu.memory_space<vmem>>) attributes {dimension_semantics = [#tpu.dimension_semantics<parallel>], iteration_bounds = array<i64: 2>, scalar_prefetch = 0 : i64, scratch_operands = 2 : i64, tpu.core_type = #tpu.core_type<tc>, window_params = [{transform_indices = @transform_0, window_bounds = array<i64: 1, 8, 32>}, {pipeline_mode = #tpu.pipeline_mode<synchronous>, transform_indices = @transform_1, window_bounds = array<i64: 32, 96>}, {pipeline_mode = #tpu.pipeline_mode<synchronous>, transform_indices = @transform_2, window_bounds = array<i64: 1, 96>}, {transform_indices = @transform_3, window_bounds = array<i64: 1, 8, 32>}, {transform_indices = @transform_4, window_bounds = array<i64: 1, 4, 8, 8>}]} {
    %c0 = arith.constant 0 : index
    %c0_0 = arith.constant 0 : index
    %c0_1 = arith.constant 0 : index
    %0 = vector.load %arg1[%c0, %c0_0, %c0_1] : memref<1x8x32xf32, #tpu.memory_space<vmem>>, vector<1x8x32xf32>
    %1 = vector.shape_cast %0 : vector<1x8x32xf32> to vector<8x32xf32>
    %c0_2 = arith.constant 0 : index
    %c0_3 = arith.constant 0 : index
    %2 = vector.load %arg2[%c0_2, %c0_3] : memref<32x96xf32, #tpu.memory_space<vmem>>, vector<32x96xf32>
    %cst = arith.constant dense<0.000000e+00> : vector<8x96xf32>
    %3 = tpu.matmul %1, %2, %cst {dimension_numbers = #tpu.dot_dimension_numbers<[1], [0], [0], [1], [0, 0, 1, 1], [], []>} : vector<8x32xf32>, vector<32x96xf32>, vector<8x96xf32> -> vector<8x96xf32>
    %c0_4 = arith.constant 0 : index
    %c0_5 = arith.constant 0 : index
    %4 = vector.load %arg3[%c0_4, %c0_5] : memref<1x96xf32, #tpu.memory_space<vmem>>, vector<1x96xf32>
    %5 = vector.broadcast %4 : vector<1x96xf32> to vector<8x96xf32>
    %6 = arith.addf %3, %5 : vector<8x96xf32>
    %c0_6 = arith.constant 0 : index
    %c0_7 = arith.constant 0 : index
    %7 = vector.load %arg6[%c0_6, %c0_7] : memref<8x96xf32, #tpu.memory_space<vmem>>, vector<8x96xf32>
    tpu.vector_store %arg6[%c0_6, %c0_7], %6 {strides = array<i32>} : memref<8x96xf32, #tpu.memory_space<vmem>>, vector<8x96xf32>,
    %c0_8 = arith.constant 0 : index
    %c0_9 = arith.constant 0 : index
    %8 = vector.load %arg6[%c0_8, %c0_9] : memref<8x96xf32, #tpu.memory_space<vmem>>, vector<8x8xf32>
    %c0_10 = arith.constant 0 : index
    %c32 = arith.constant 32 : index
    %9 = vector.load %arg6[%c0_10, %c32] : memref<8x96xf32, #tpu.memory_space<vmem>>, vector<8x8xf32>
    %c0_11 = arith.constant 0 : index
    %c64 = arith.constant 64 : index
    %10 = vector.load %arg6[%c0_11, %c64] : memref<8x96xf32, #tpu.memory_space<vmem>>, vector<8x8xf32>
    %cst_12 = arith.constant dense<0.000000e+00> : vector<8x8xf32>
    %11 = tpu.matmul %8, %9, %cst_12 {dimension_numbers = #tpu.dot_dimension_numbers<[1], [1], [0], [0], [0, 0, 1, 0], [], []>} : vector<8x8xf32>, vector<8x8xf32>, vector<8x8xf32> -> vector<8x8xf32>
    %cst_13 = arith.constant dense<0xFF800000> : vector<8xf32>
    %12 = vector.multi_reduction <maximumf>, %11, %cst_13 [1] : vector<8x8xf32> to vector<8xf32>
    %13 = vector.shape_cast %12 : vector<8xf32> to vector<8x1xf32>
    %14 = vector.broadcast %13 : vector<8x1xf32> to vector<8x8xf32>
    %15 = arith.subf %11, %14 : vector<8x8xf32>
    %16 = math.exp %15 : vector<8x8xf32>
    %cst_14 = arith.constant dense<0.000000e+00> : vector<8xf32>
    %17 = vector.multi_reduction <add>, %16, %cst_14 [1] : vector<8x8xf32> to vector<8xf32>
    %18 = vector.shape_cast %17 : vector<8xf32> to vector<8x1xf32>
    %19 = tpu.reciprocal %18 {approx = true} : vector<8x1xf32> -> vector<8x1xf32>
    %20 = vector.broadcast %19 : vector<8x1xf32> to vector<8x8xf32>
    %21 = arith.mulf %16, %20 : vector<8x8xf32>
    %c0_15 = arith.constant 0 : index
    %c0_16 = arith.constant 0 : index
    %c0_17 = arith.constant 0 : index
    %c0_18 = arith.constant 0 : index
    %22 = vector.load %arg5[%c0_15, %c0_16, %c0_17, %c0_18] : memref<1x4x8x8xf32, #tpu.memory_space<vmem>>, vector<1x1x8x8xf32>
    %23 = vector.shape_cast %22 : vector<1x1x8x8xf32> to vector<8x8xf32>
    %24 = vector.shape_cast %21 : vector<8x8xf32> to vector<1x1x8x8xf32>
    tpu.vector_store %arg5[%c0_15, %c0_16, %c0_17, %c0_18], %24 {strides = array<i32>} : memref<1x4x8x8xf32, #tpu.memory_space<vmem>>, vector<1x1x8x8xf32>,
    %cst_19 = arith.constant dense<0.000000e+00> : vector<8x8xf32>
    %25 = tpu.matmul %21, %10, %cst_19 {dimension_numbers = #tpu.dot_dimension_numbers<[1], [0], [0], [1], [0, 0, 1, 1], [], []>} : vector<8x8xf32>, vector<8x8xf32>, vector<8x8xf32> -> vector<8x8xf32>
    %c0_20 = arith.constant 0 : index
    %c0_21 = arith.constant 0 : index
    %26 = vector.load %arg7[%c0_20, %c0_21] : memref<8x32xf32, #tpu.memory_space<vmem>>, vector<8x8xf32>
    tpu.vector_store %arg7[%c0_20, %c0_21], %25 {strides = array<i32>} : memref<8x32xf32, #tpu.memory_space<vmem>>, vector<8x8xf32>,
    %c0_22 = arith.constant 0 : index
    %c8 = arith.constant 8 : index
    %27 = vector.load %arg6[%c0_22, %c8] : memref<8x96xf32, #tpu.memory_space<vmem>>, vector<8x8xf32>
    %c0_23 = arith.constant 0 : index
    %c40 = arith.constant 40 : index
    %28 = vector.load %arg6[%c0_23, %c40] : memref<8x96xf32, #tpu.memory_space<vmem>>, vector<8x8xf32>
    %c0_24 = arith.constant 0 : index
    %c72 = arith.constant 72 : index
    %29 = vector.load %arg6[%c0_24, %c72] : memref<8x96xf32, #tpu.memory_space<vmem>>, vector<8x8xf32>
    %cst_25 = arith.constant dense<0.000000e+00> : vector<8x8xf32>
    %30 = tpu.matmul %27, %28, %cst_25 {dimension_numbers = #tpu.dot_dimension_numbers<[1], [1], [0], [0], [0, 0, 1, 0], [], []>} : vector<8x8xf32>, vector<8x8xf32>, vector<8x8xf32> -> vector<8x8xf32>
    %cst_26 = arith.constant dense<0xFF800000> : vector<8xf32>
    %31 = vector.multi_reduction <maximumf>, %30, %cst_26 [1] : vector<8x8xf32> to vector<8xf32>
    %32 = vector.shape_cast %31 : vector<8xf32> to vector<8x1xf32>
    %33 = vector.broadcast %32 : vector<8x1xf32> to vector<8x8xf32>
    %34 = arith.subf %30, %33 : vector<8x8xf32>
    %35 = math.exp %34 : vector<8x8xf32>
    %cst_27 = arith.constant dense<0.000000e+00> : vector<8xf32>
    %36 = vector.multi_reduction <add>, %35, %cst_27 [1] : vector<8x8xf32> to vector<8xf32>
    %37 = vector.shape_cast %36 : vector<8xf32> to vector<8x1xf32>
    %38 = tpu.reciprocal %37 {approx = true} : vector<8x1xf32> -> vector<8x1xf32>
    %39 = vector.broadcast %38 : vector<8x1xf32> to vector<8x8xf32>
    %40 = arith.mulf %35, %39 : vector<8x8xf32>
    %c0_28 = arith.constant 0 : index
    %c1 = arith.constant 1 : index
    %c0_29 = arith.constant 0 : index
    %c0_30 = arith.constant 0 : index
    %41 = vector.load %arg5[%c0_28, %c1, %c0_29, %c0_30] : memref<1x4x8x8xf32, #tpu.memory_space<vmem>>, vector<1x1x8x8xf32>
    %42 = vector.shape_cast %41 : vector<1x1x8x8xf32> to vector<8x8xf32>
    %43 = vector.shape_cast %40 : vector<8x8xf32> to vector<1x1x8x8xf32>
    tpu.vector_store %arg5[%c0_28, %c1, %c0_29, %c0_30], %43 {strides = array<i32>} : memref<1x4x8x8xf32, #tpu.memory_space<vmem>>, vector<1x1x8x8xf32>,
    %cst_31 = arith.constant dense<0.000000e+00> : vector<8x8xf32>
    %44 = tpu.matmul %40, %29, %cst_31 {dimension_numbers = #tpu.dot_dimension_numbers<[1], [0], [0], [1], [0, 0, 1, 1], [], []>} : vector<8x8xf32>, vector<8x8xf32>, vector<8x8xf32> -> vector<8x8xf32>
    %c0_32 = arith.constant 0 : index
    %c8_33 = arith.constant 8 : index
    %45 = vector.load %arg7[%c0_32, %c8_33] : memref<8x32xf32, #tpu.memory_space<vmem>>, vector<8x8xf32>
    tpu.vector_store %arg7[%c0_32, %c8_33], %44 {strides = array<i32>} : memref<8x32xf32, #tpu.memory_space<vmem>>, vector<8x8xf32>,
    %c0_34 = arith.constant 0 : index
    %c16 = arith.constant 16 : index
    %46 = vector.load %arg6[%c0_34, %c16] : memref<8x96xf32, #tpu.memory_space<vmem>>, vector<8x8xf32>
    %c0_35 = arith.constant 0 : index
    %c48 = arith.constant 48 : index
    %47 = vector.load %arg6[%c0_35, %c48] : memref<8x96xf32, #tpu.memory_space<vmem>>, vector<8x8xf32>
    %c0_36 = arith.constant 0 : index
    %c80 = arith.constant 80 : index
    %48 = vector.load %arg6[%c0_36, %c80] : memref<8x96xf32, #tpu.memory_space<vmem>>, vector<8x8xf32>
    %cst_37 = arith.constant dense<0.000000e+00> : vector<8x8xf32>
    %49 = tpu.matmul %46, %47, %cst_37 {dimension_numbers = #tpu.dot_dimension_numbers<[1], [1], [0], [0], [0, 0, 1, 0], [], []>} : vector<8x8xf32>, vector<8x8xf32>, vector<8x8xf32> -> vector<8x8xf32>
    %cst_38 = arith.constant dense<0xFF800000> : vector<8xf32>
    %50 = vector.multi_reduction <maximumf>, %49, %cst_38 [1] : vector<8x8xf32> to vector<8xf32>
    %51 = vector.shape_cast %50 : vector<8xf32> to vector<8x1xf32>
    %52 = vector.broadcast %51 : vector<8x1xf32> to vector<8x8xf32>
    %53 = arith.subf %49, %52 : vector<8x8xf32>
    %54 = math.exp %53 : vector<8x8xf32>
    %cst_39 = arith.constant dense<0.000000e+00> : vector<8xf32>
    %55 = vector.multi_reduction <add>, %54, %cst_39 [1] : vector<8x8xf32> to vector<8xf32>
    %56 = vector.shape_cast %55 : vector<8xf32> to vector<8x1xf32>
    %57 = tpu.reciprocal %56 {approx = true} : vector<8x1xf32> -> vector<8x1xf32>
    %58 = vector.broadcast %57 : vector<8x1xf32> to vector<8x8xf32>
    %59 = arith.mulf %54, %58 : vector<8x8xf32>
    %c0_40 = arith.constant 0 : index
    %c2 = arith.constant 2 : index
    %c0_41 = arith.constant 0 : index
    %c0_42 = arith.constant 0 : index
    %60 = vector.load %arg5[%c0_40, %c2, %c0_41, %c0_42] : memref<1x4x8x8xf32, #tpu.memory_space<vmem>>, vector<1x1x8x8xf32>
    %61 = vector.shape_cast %60 : vector<1x1x8x8xf32> to vector<8x8xf32>
    %62 = vector.shape_cast %59 : vector<8x8xf32> to vector<1x1x8x8xf32>
    tpu.vector_store %arg5[%c0_40, %c2, %c0_41, %c0_42], %62 {strides = array<i32>} : memref<1x4x8x8xf32, #tpu.memory_space<vmem>>, vector<1x1x8x8xf32>,
    %cst_43 = arith.constant dense<0.000000e+00> : vector<8x8xf32>
    %63 = tpu.matmul %59, %48, %cst_43 {dimension_numbers = #tpu.dot_dimension_numbers<[1], [0], [0], [1], [0, 0, 1, 1], [], []>} : vector<8x8xf32>, vector<8x8xf32>, vector<8x8xf32> -> vector<8x8xf32>
    %c0_44 = arith.constant 0 : index
    %c16_45 = arith.constant 16 : index
    %64 = vector.load %arg7[%c0_44, %c16_45] : memref<8x32xf32, #tpu.memory_space<vmem>>, vector<8x8xf32>
    tpu.vector_store %arg7[%c0_44, %c16_45], %63 {strides = array<i32>} : memref<8x32xf32, #tpu.memory_space<vmem>>, vector<8x8xf32>,
    %c0_46 = arith.constant 0 : index
    %c24 = arith.constant 24 : index
    %65 = vector.load %arg6[%c0_46, %c24] : memref<8x96xf32, #tpu.memory_space<vmem>>, vector<8x8xf32>
    %c0_47 = arith.constant 0 : index
    %c56 = arith.constant 56 : index
    %66 = vector.load %arg6[%c0_47, %c56] : memref<8x96xf32, #tpu.memory_space<vmem>>, vector<8x8xf32>
    %c0_48 = arith.constant 0 : index
    %c88 = arith.constant 88 : index
    %67 = vector.load %arg6[%c0_48, %c88] : memref<8x96xf32, #tpu.memory_space<vmem>>, vector<8x8xf32>
    %cst_49 = arith.constant dense<0.000000e+00> : vector<8x8xf32>
    %68 = tpu.matmul %65, %66, %cst_49 {dimension_numbers = #tpu.dot_dimension_numbers<[1], [1], [0], [0], [0, 0, 1, 0], [], []>} : vector<8x8xf32>, vector<8x8xf32>, vector<8x8xf32> -> vector<8x8xf32>
    %cst_50 = arith.constant dense<0xFF800000> : vector<8xf32>
    %69 = vector.multi_reduction <maximumf>, %68, %cst_50 [1] : vector<8x8xf32> to vector<8xf32>
    %70 = vector.shape_cast %69 : vector<8xf32> to vector<8x1xf32>
    %71 = vector.broadcast %70 : vector<8x1xf32> to vector<8x8xf32>
    %72 = arith.subf %68, %71 : vector<8x8xf32>
    %73 = math.exp %72 : vector<8x8xf32>
    %cst_51 = arith.constant dense<0.000000e+00> : vector<8xf32>
    %74 = vector.multi_reduction <add>, %73, %cst_51 [1] : vector<8x8xf32> to vector<8xf32>
    %75 = vector.shape_cast %74 : vector<8xf32> to vector<8x1xf32>
    %76 = tpu.reciprocal %75 {approx = true} : vector<8x1xf32> -> vector<8x1xf32>
    %77 = vector.broadcast %76 : vector<8x1xf32> to vector<8x8xf32>
    %78 = arith.mulf %73, %77 : vector<8x8xf32>
    %c0_52 = arith.constant 0 : index
    %c3 = arith.constant 3 : index
    %c0_53 = arith.constant 0 : index
    %c0_54 = arith.constant 0 : index
    %79 = vector.load %arg5[%c0_52, %c3, %c0_53, %c0_54] : memref<1x4x8x8xf32, #tpu.memory_space<vmem>>, vector<1x1x8x8xf32>
    %80 = vector.shape_cast %79 : vector<1x1x8x8xf32> to vector<8x8xf32>
    %81 = vector.shape_cast %78 : vector<8x8xf32> to vector<1x1x8x8xf32>
    tpu.vector_store %arg5[%c0_52, %c3, %c0_53, %c0_54], %81 {strides = array<i32>} : memref<1x4x8x8xf32, #tpu.memory_space<vmem>>, vector<1x1x8x8xf32>,
    %cst_55 = arith.constant dense<0.000000e+00> : vector<8x8xf32>
    %82 = tpu.matmul %78, %67, %cst_55 {dimension_numbers = #tpu.dot_dimension_numbers<[1], [0], [0], [1], [0, 0, 1, 1], [], []>} : vector<8x8xf32>, vector<8x8xf32>, vector<8x8xf32> -> vector<8x8xf32>
    %c0_56 = arith.constant 0 : index
    %c24_57 = arith.constant 24 : index
    %83 = vector.load %arg7[%c0_56, %c24_57] : memref<8x32xf32, #tpu.memory_space<vmem>>, vector<8x8xf32>
    tpu.vector_store %arg7[%c0_56, %c24_57], %82 {strides = array<i32>} : memref<8x32xf32, #tpu.memory_space<vmem>>, vector<8x8xf32>,
    %c0_58 = arith.constant 0 : index
    %c0_59 = arith.constant 0 : index
    %84 = vector.load %arg7[%c0_58, %c0_59] : memref<8x32xf32, #tpu.memory_space<vmem>>, vector<8x32xf32>
    %c0_60 = arith.constant 0 : index
    %c0_61 = arith.constant 0 : index
    %c0_62 = arith.constant 0 : index
    %85 = vector.load %arg4[%c0_60, %c0_61, %c0_62] : memref<1x8x32xf32, #tpu.memory_space<vmem>>, vector<1x8x32xf32>
    %86 = vector.shape_cast %85 : vector<1x8x32xf32> to vector<8x32xf32>
    %87 = vector.shape_cast %84 : vector<8x32xf32> to vector<1x8x32xf32>
    tpu.vector_store %arg4[%c0_60, %c0_61, %c0_62], %87 {strides = array<i32>} : memref<1x8x32xf32, #tpu.memory_space<vmem>>, vector<1x8x32xf32>,
    return
  }
  func.func @transform_0(%arg0: i32) -> (i32, i32, i32) {
    %c0_i32 = arith.constant 0 : i32
    %c0_i32_0 = arith.constant 0 : i32
    %c0_i32_1 = arith.constant 0 : i32
    return %arg0, %c0_i32, %c0_i32_0 : i32, i32, i32
  }
  func.func @transform_1(%arg0: i32) -> (i32, i32) {
    %c0_i32 = arith.constant 0 : i32
    %c0_i32_0 = arith.constant 0 : i32
    %c0_i32_1 = arith.constant 0 : i32
    return %c0_i32, %c0_i32_0 : i32, i32
  }
  func.func @transform_2(%arg0: i32) -> (i32, i32) {
    %c0_i32 = arith.constant 0 : i32
    %c0_i32_0 = arith.constant 0 : i32
    %c0_i32_1 = arith.constant 0 : i32
    return %c0_i32, %c0_i32_0 : i32, i32
  }
  func.func @transform_3(%arg0: i32) -> (i32, i32, i32) {
    %c0_i32 = arith.constant 0 : i32
    %c0_i32_0 = arith.constant 0 : i32
    %c0_i32_1 = arith.constant 0 : i32
    return %arg0, %c0_i32, %c0_i32_0 : i32, i32, i32
  }
  func.func @transform_4(%arg0: i32) -> (i32, i32, i32, i32) {
    %c0_i32 = arith.constant 0 : i32
    %c0_i32_0 = arith.constant 0 : i32
    %c0_i32_1 = arith.constant 0 : i32
    %c0_i32_2 = arith.constant 0 : i32
    return %arg0, %c0_i32, %c0_i32_0, %c0_i32_1 : i32, i32, i32, i32
  }
}

module attributes {stable_mosaic.version = 11 : i64} {
  func.func @_moa_kernel(%arg0: i32, %arg1: memref<1x8x32xf32, #tpu.memory_space<vmem>>, %arg2: memref<32x96xf32, #tpu.memory_space<vmem>>, %arg3: memref<1x96xf32, #tpu.memory_space<vmem>>, %arg4: memref<1x8x32xf32, #tpu.memory_space<vmem>>, %arg5: memref<1x4x8x8xf32, #tpu.memory_space<vmem>>, %arg6: memref<8x96xf32, #tpu.memory_space<vmem>>, %arg7: memref<8x32xf32, #tpu.memory_space<vmem>>) attributes {dimension_semantics = [#tpu.dimension_semantics<parallel>], iteration_bounds = array<i64: 2>, scalar_prefetch = 0 : i64, scratch_operands = 2 : i64, tpu.core_type = #tpu.core_type<tc>, window_params = [{transform_indices = @transform_0, window_bounds = array<i64: 1, 8, 32>}, {pipeline_mode = #tpu.pipeline_mode<synchronous>, transform_indices = @transform_1, window_bounds = array<i64: 32, 96>}, {pipeline_mode = #tpu.pipeline_mode<synchronous>, transform_indices = @transform_2, window_bounds = array<i64: 1, 96>}, {transform_indices = @transform_3, window_bounds = array<i64: 1, 8, 32>}, {transform_indices = @transform_4, window_bounds = array<i64: 1, 4, 8, 8>}]} {
    %c0 = arith.constant 0 : index
    %c0_0 = arith.constant 0 : index
    %c0_1 = arith.constant 0 : index
    %0 = vector.load %arg1[%c0, %c0_0, %c0_1] : memref<1x8x32xf32, #tpu.memory_space<vmem>>, vector<1x8x32xf32>
    %1 = vector.shape_cast %0 : vector<1x8x32xf32> to vector<8x32xf32>
    %c0_2 = arith.constant 0 : index
    %c0_3 = arith.constant 0 : index
    %2 = vector.load %arg2[%c0_2, %c0_3] : memref<32x96xf32, #tpu.memory_space<vmem>>, vector<32x96xf32>
    %cst = arith.constant dense<0.000000e+00> : vector<8x96xf32>
    %3 = tpu.matmul %1, %2, %cst {dimension_numbers = #tpu.dot_dimension_numbers<[1], [0], [0], [1], [0, 0, 1, 1], [], []>} : vector<8x32xf32>, vector<32x96xf32>, vector<8x96xf32> -> vector<8x96xf32>
    %c0_4 = arith.constant 0 : index
    %c0_5 = arith.constant 0 : index
    %4 = vector.load %arg3[%c0_4, %c0_5] : memref<1x96xf32, #tpu.memory_space<vmem>>, vector<1x96xf32>
    %5 = vector.broadcast %4 : vector<1x96xf32> to vector<8x96xf32>
    %6 = arith.addf %3, %5 : vector<8x96xf32>
    %c0_6 = arith.constant 0 : index
    %c0_7 = arith.constant 0 : index
    %7 = vector.load %arg6[%c0_6, %c0_7] : memref<8x96xf32, #tpu.memory_space<vmem>>, vector<8x96xf32>
    tpu.vector_store %arg6[%c0_6, %c0_7], %6 {strides = array<i32>} : memref<8x96xf32, #tpu.memory_space<vmem>>, vector<8x96xf32>,
    %c0_8 = arith.constant 0 : index
    %c0_9 = arith.constant 0 : index
    %8 = vector.load %arg6[%c0_8, %c0_9] : memref<8x96xf32, #tpu.memory_space<vmem>>, vector<8x8xf32>
    %c0_10 = arith.constant 0 : index
    %c32 = arith.constant 32 : index
    %9 = vector.load %arg6[%c0_10, %c32] : memref<8x96xf32, #tpu.memory_space<vmem>>, vector<8x8xf32>
    %c0_11 = arith.constant 0 : index
    %c64 = arith.constant 64 : index
    %10 = vector.load %arg6[%c0_11, %c64] : memref<8x96xf32, #tpu.memory_space<vmem>>, vector<8x8xf32>
    %cst_12 = arith.constant dense<0.000000e+00> : vector<8x8xf32>
    %11 = tpu.matmul %8, %9, %cst_12 {dimension_numbers = #tpu.dot_dimension_numbers<[1], [1], [0], [0], [0, 0, 1, 0], [], []>} : vector<8x8xf32>, vector<8x8xf32>, vector<8x8xf32> -> vector<8x8xf32>
    %cst_13 = arith.constant dense<0xFF800000> : vector<8xf32>
    %12 = vector.multi_reduction <maximumf>, %11, %cst_13 [1] : vector<8x8xf32> to vector<8xf32>
    %13 = vector.shape_cast %12 : vector<8xf32> to vector<8x1xf32>
    %14 = vector.broadcast %13 : vector<8x1xf32> to vector<8x8xf32>
    %15 = arith.subf %11, %14 : vector<8x8xf32>
    %16 = math.exp %15 : vector<8x8xf32>
    %cst_14 = arith.constant dense<0.000000e+00> : vector<8xf32>
    %17 = vector.multi_reduction <add>, %16, %cst_14 [1] : vector<8x8xf32> to vector<8xf32>
    %18 = vector.shape_cast %17 : vector<8xf32> to vector<8x1xf32>
    %19 = tpu.reciprocal %18 {approx = true} : vector<8x1xf32> -> vector<8x1xf32>
    %20 = vector.broadcast %19 : vector<8x1xf32> to vector<8x8xf32>
    %21 = arith.mulf %16, %20 : vector<8x8xf32>
    %c0_15 = arith.constant 0 : index
    %c0_16 = arith.constant 0 : index
    %c0_17 = arith.constant 0 : index
    %c0_18 = arith.constant 0 : index
    %22 = vector.load %arg5[%c0_15, %c0_16, %c0_17, %c0_18] : memref<1x4x8x8xf32, #tpu.memory_space<vmem>>, vector<1x1x8x8xf32>
    %23 = vector.shape_cast %22 : vector<1x1x8x8xf32> to vector<8x8xf32>
    %24 = vector.shape_cast %21 : vector<8x8xf32> to vector<1x1x8x8xf32>
    tpu.vector_store %arg5[%c0_15, %c0_16, %c0_17, %c0_18], %24 {strides = array<i32>} : memref<1x4x8x8xf32, #tpu.memory_space<vmem>>, vector<1x1x8x8xf32>,
    %cst_19 = arith.constant dense<0.000000e+00> : vector<8x8xf32>
    %25 = tpu.matmul %21, %10, %cst_19 {dimension_numbers = #tpu.dot_dimension_numbers<[1], [0], [0], [1], [0, 0, 1, 1], [], []>} : vector<8x8xf32>, vector<8x8xf32>, vector<8x8xf32> -> vector<8x8xf32>
    %c0_20 = arith.constant 0 : index
    %c0_21 = arith.constant 0 : index
    %26 = vector.load %arg7[%c0_20, %c0_21] : memref<8x32xf32, #tpu.memory_space<vmem>>, vector<8x8xf32>
    tpu.vector_store %arg7[%c0_20, %c0_21], %25 {strides = array<i32>} : memref<8x32xf32, #tpu.memory_space<vmem>>, vector<8x8xf32>,
    %c0_22 = arith.constant 0 : index
    %c8 = arith.constant 8 : index
    %27 = vector.load %arg6[%c0_22, %c8] : memref<8x96xf32, #tpu.memory_space<vmem>>, vector<8x8xf32>
    %c0_23 = arith.constant 0 : index
    %c40 = arith.constant 40 : index
    %28 = vector.load %arg6[%c0_23, %c40] : memref<8x96xf32, #tpu.memory_space<vmem>>, vector<8x8xf32>
    %c0_24 = arith.constant 0 : index
    %c72 = arith.constant 72 : index
    %29 = vector.load %arg6[%c0_24, %c72] : memref<8x96xf32, #tpu.memory_space<vmem>>, vector<8x8xf32>
    %cst_25 = arith.constant dense<0.000000e+00> : vector<8x8xf32>
    %30 = tpu.matmul %27, %28, %cst_25 {dimension_numbers = #tpu.dot_dimension_numbers<[1], [1], [0], [0], [0, 0, 1, 0], [], []>} : vector<8x8xf32>, vector<8x8xf32>, vector<8x8xf32> -> vector<8x8xf32>
    %cst_26 = arith.constant dense<0xFF800000> : vector<8xf32>
    %31 = vector.multi_reduction <maximumf>, %30, %cst_26 [1] : vector<8x8xf32> to vector<8xf32>
    %32 = vector.shape_cast %31 : vector<8xf32> to vector<8x1xf32>
    %33 = vector.broadcast %32 : vector<8x1xf32> to vector<8x8xf32>
    %34 = arith.subf %30, %33 : vector<8x8xf32>
    %35 = math.exp %34 : vector<8x8xf32>
    %cst_27 = arith.constant dense<0.000000e+00> : vector<8xf32>
    %36 = vector.multi_reduction <add>, %35, %cst_27 [1] : vector<8x8xf32> to vector<8xf32>
    %37 = vector.shape_cast %36 : vector<8xf32> to vector<8x1xf32>
    %38 = tpu.reciprocal %37 {approx = true} : vector<8x1xf32> -> vector<8x1xf32>
    %39 = vector.broadcast %38 : vector<8x1xf32> to vector<8x8xf32>
    %40 = arith.mulf %35, %39 : vector<8x8xf32>
    %c0_28 = arith.constant 0 : index
    %c1 = arith.constant 1 : index
    %c0_29 = arith.constant 0 : index
    %c0_30 = arith.constant 0 : index
    %41 = vector.load %arg5[%c0_28, %c1, %c0_29, %c0_30] : memref<1x4x8x8xf32, #tpu.memory_space<vmem>>, vector<1x1x8x8xf32>
    %42 = vector.shape_cast %41 : vector<1x1x8x8xf32> to vector<8x8xf32>
    %43 = vector.shape_cast %40 : vector<8x8xf32> to vector<1x1x8x8xf32>
    tpu.vector_store %arg5[%c0_28, %c1, %c0_29, %c0_30], %43 {strides = array<i32>} : memref<1x4x8x8xf32, #tpu.memory_space<vmem>>, vector<1x1x8x8xf32>,
    %cst_31 = arith.constant dense<0.000000e+00> : vector<8x8xf32>
    %44 = tpu.matmul %40, %29, %cst_31 {dimension_numbers = #tpu.dot_dimension_numbers<[1], [0], [0], [1], [0, 0, 1, 1], [], []>} : vector<8x8xf32>, vector<8x8xf32>, vector<8x8xf32> -> vector<8x8xf32>
    %c0_32 = arith.constant 0 : index
    %c8_33 = arith.constant 8 : index
    %45 = vector.load %arg7[%c0_32, %c8_33] : memref<8x32xf32, #tpu.memory_space<vmem>>, vector<8x8xf32>
    tpu.vector_store %arg7[%c0_32, %c8_33], %44 {strides = array<i32>} : memref<8x32xf32, #tpu.memory_space<vmem>>, vector<8x8xf32>,
    %c0_34 = arith.constant 0 : index
    %c16 = arith.constant 16 : index
    %46 = vector.load %arg6[%c0_34, %c16] : memref<8x96xf32, #tpu.memory_space<vmem>>, vector<8x8xf32>
    %c0_35 = arith.constant 0 : index
    %c48 = arith.constant 48 : index
    %47 = vector.load %arg6[%c0_35, %c48] : memref<8x96xf32, #tpu.memory_space<vmem>>, vector<8x8xf32>
    %c0_36 = arith.constant 0 : index
    %c80 = arith.constant 80 : index
    %48 = vector.load %arg6[%c0_36, %c80] : memref<8x96xf32, #tpu.memory_space<vmem>>, vector<8x8xf32>
    %cst_37 = arith.constant dense<0.000000e+00> : vector<8x8xf32>
    %49 = tpu.matmul %46, %47, %cst_37 {dimension_numbers = #tpu.dot_dimension_numbers<[1], [1], [0], [0], [0, 0, 1, 0], [], []>} : vector<8x8xf32>, vector<8x8xf32>, vector<8x8xf32> -> vector<8x8xf32>
    %cst_38 = arith.constant dense<0xFF800000> : vector<8xf32>
    %50 = vector.multi_reduction <maximumf>, %49, %cst_38 [1] : vector<8x8xf32> to vector<8xf32>
    %51 = vector.shape_cast %50 : vector<8xf32> to vector<8x1xf32>
    %52 = vector.broadcast %51 : vector<8x1xf32> to vector<8x8xf32>
    %53 = arith.subf %49, %52 : vector<8x8xf32>
    %54 = math.exp %53 : vector<8x8xf32>
    %cst_39 = arith.constant dense<0.000000e+00> : vector<8xf32>
    %55 = vector.multi_reduction <add>, %54, %cst_39 [1] : vector<8x8xf32> to vector<8xf32>
    %56 = vector.shape_cast %55 : vector<8xf32> to vector<8x1xf32>
    %57 = tpu.reciprocal %56 {approx = true} : vector<8x1xf32> -> vector<8x1xf32>
    %58 = vector.broadcast %57 : vector<8x1xf32> to vector<8x8xf32>
    %59 = arith.mulf %54, %58 : vector<8x8xf32>
    %c0_40 = arith.constant 0 : index
    %c2 = arith.constant 2 : index
    %c0_41 = arith.constant 0 : index
    %c0_42 = arith.constant 0 : index
    %60 = vector.load %arg5[%c0_40, %c2, %c0_41, %c0_42] : memref<1x4x8x8xf32, #tpu.memory_space<vmem>>, vector<1x1x8x8xf32>
    %61 = vector.shape_cast %60 : vector<1x1x8x8xf32> to vector<8x8xf32>
    %62 = vector.shape_cast %59 : vector<8x8xf32> to vector<1x1x8x8xf32>
    tpu.vector_store %arg5[%c0_40, %c2, %c0_41, %c0_42], %62 {strides = array<i32>} : memref<1x4x8x8xf32, #tpu.memory_space<vmem>>, vector<1x1x8x8xf32>,
    %cst_43 = arith.constant dense<0.000000e+00> : vector<8x8xf32>
    %63 = tpu.matmul %59, %48, %cst_43 {dimension_numbers = #tpu.dot_dimension_numbers<[1], [0], [0], [1], [0, 0, 1, 1], [], []>} : vector<8x8xf32>, vector<8x8xf32>, vector<8x8xf32> -> vector<8x8xf32>
    %c0_44 = arith.constant 0 : index
    %c16_45 = arith.constant 16 : index
    %64 = vector.load %arg7[%c0_44, %c16_45] : memref<8x32xf32, #tpu.memory_space<vmem>>, vector<8x8xf32>
    tpu.vector_store %arg7[%c0_44, %c16_45], %63 {strides = array<i32>} : memref<8x32xf32, #tpu.memory_space<vmem>>, vector<8x8xf32>,
    %c0_46 = arith.constant 0 : index
    %c24 = arith.constant 24 : index
    %65 = vector.load %arg6[%c0_46, %c24] : memref<8x96xf32, #tpu.memory_space<vmem>>, vector<8x8xf32>
    %c0_47 = arith.constant 0 : index
    %c56 = arith.constant 56 : index
    %66 = vector.load %arg6[%c0_47, %c56] : memref<8x96xf32, #tpu.memory_space<vmem>>, vector<8x8xf32>
    %c0_48 = arith.constant 0 : index
    %c88 = arith.constant 88 : index
    %67 = vector.load %arg6[%c0_48, %c88] : memref<8x96xf32, #tpu.memory_space<vmem>>, vector<8x8xf32>
    %cst_49 = arith.constant dense<0.000000e+00> : vector<8x8xf32>
    %68 = tpu.matmul %65, %66, %cst_49 {dimension_numbers = #tpu.dot_dimension_numbers<[1], [1], [0], [0], [0, 0, 1, 0], [], []>} : vector<8x8xf32>, vector<8x8xf32>, vector<8x8xf32> -> vector<8x8xf32>
    %cst_50 = arith.constant dense<0xFF800000> : vector<8xf32>
    %69 = vector.multi_reduction <maximumf>, %68, %cst_50 [1] : vector<8x8xf32> to vector<8xf32>
    %70 = vector.shape_cast %69 : vector<8xf32> to vector<8x1xf32>
    %71 = vector.broadcast %70 : vector<8x1xf32> to vector<8x8xf32>
    %72 = arith.subf %68, %71 : vector<8x8xf32>
    %73 = math.exp %72 : vector<8x8xf32>
    %cst_51 = arith.constant dense<0.000000e+00> : vector<8xf32>
    %74 = vector.multi_reduction <add>, %73, %cst_51 [1] : vector<8x8xf32> to vector<8xf32>
    %75 = vector.shape_cast %74 : vector<8xf32> to vector<8x1xf32>
    %76 = tpu.reciprocal %75 {approx = true} : vector<8x1xf32> -> vector<8x1xf32>
    %77 = vector.broadcast %76 : vector<8x1xf32> to vector<8x8xf32>
    %78 = arith.mulf %73, %77 : vector<8x8xf32>
    %c0_52 = arith.constant 0 : index
    %c3 = arith.constant 3 : index
    %c0_53 = arith.constant 0 : index
    %c0_54 = arith.constant 0 : index
    %79 = vector.load %arg5[%c0_52, %c3, %c0_53, %c0_54] : memref<1x4x8x8xf32, #tpu.memory_space<vmem>>, vector<1x1x8x8xf32>
    %80 = vector.shape_cast %79 : vector<1x1x8x8xf32> to vector<8x8xf32>
    %81 = vector.shape_cast %78 : vector<8x8xf32> to vector<1x1x8x8xf32>
    tpu.vector_store %arg5[%c0_52, %c3, %c0_53, %c0_54], %81 {strides = array<i32>} : memref<1x4x8x8xf32, #tpu.memory_space<vmem>>, vector<1x1x8x8xf32>,
    %cst_55 = arith.constant dense<0.000000e+00> : vector<8x8xf32>
    %82 = tpu.matmul %78, %67, %cst_55 {dimension_numbers = #tpu.dot_dimension_numbers<[1], [0], [0], [1], [0, 0, 1, 1], [], []>} : vector<8x8xf32>, vector<8x8xf32>, vector<8x8xf32> -> vector<8x8xf32>
    %c0_56 = arith.constant 0 : index
    %c24_57 = arith.constant 24 : index
    %83 = vector.load %arg7[%c0_56, %c24_57] : memref<8x32xf32, #tpu.memory_space<vmem>>, vector<8x8xf32>
    tpu.vector_store %arg7[%c0_56, %c24_57], %82 {strides = array<i32>} : memref<8x32xf32, #tpu.memory_space<vmem>>, vector<8x8xf32>,
    %c0_58 = arith.constant 0 : index
    %c0_59 = arith.constant 0 : index
    %84 = vector.load %arg7[%c0_58, %c0_59] : memref<8x32xf32, #tpu.memory_space<vmem>>, vector<8x32xf32>
    %c0_60 = arith.constant 0 : index
    %c0_61 = arith.constant 0 : index
    %c0_62 = arith.constant 0 : index
    %85 = vector.load %arg4[%c0_60, %c0_61, %c0_62] : memref<1x8x32xf32, #tpu.memory_space<vmem>>, vector<1x8x32xf32>
    %86 = vector.shape_cast %85 : vector<1x8x32xf32> to vector<8x32xf32>
    %87 = vector.shape_cast %84 : vector<8x32xf32> to vector<1x8x32xf32>
    tpu.vector_store %arg4[%c0_60, %c0_61, %c0_62], %87 {strides = array<i32>} : memref<1x8x32xf32, #tpu.memory_space<vmem>>, vector<1x8x32xf32>,
    return
  }
  func.func @transform_0(%arg0: i32) -> (i32, i32, i32) {
    %c0_i32 = arith.constant 0 : i32
    %c0_i32_0 = arith.constant 0 : i32
    %c0_i32_1 = arith.constant 0 : i32
    return %arg0, %c0_i32, %c0_i32_0 : i32, i32, i32
  }
  func.func @transform_1(%arg0: i32) -> (i32, i32) {
    %c0_i32 = arith.constant 0 : i32
    %c0_i32_0 = arith.constant 0 : i32
    %c0_i32_1 = arith.constant 0 : i32
    return %c0_i32, %c0_i32_0 : i32, i32
  }
  func.func @transform_2(%arg0: i32) -> (i32, i32) {
    %c0_i32 = arith.constant 0 : i32
    %c0_i32_0 = arith.constant 0 : i32
    %c0_i32_1 = arith.constant 0 : i32
    return %c0_i32, %c0_i32_0 : i32, i32
  }
  func.func @transform_3(%arg0: i32) -> (i32, i32, i32) {
    %c0_i32 = arith.constant 0 : i32
    %c0_i32_0 = arith.constant 0 : i32
    %c0_i32_1 = arith.constant 0 : i32
    return %arg0, %c0_i32, %c0_i32_0 : i32, i32, i32
  }
  func.func @transform_4(%arg0: i32) -> (i32, i32, i32, i32) {
    %c0_i32 = arith.constant 0 : i32
    %c0_i32_0 = arith.constant 0 : i32
    %c0_i32_1 = arith.constant 0 : i32
    %c0_i32_2 = arith.constant 0 : i32
    return %arg0, %c0_i32, %c0_i32_0, %c0_i32_1 : i32, i32, i32, i32
  }
}

</mosaic_0001>

<llo_original>
// kernel: tpu_custom_call.1
$region0: #{tpu_custom_call.1}
  #allocation0 [shape = 'u32[]', space=smem, size = 0x4, offset = 0x4, fixed_abs, tag = 'smem constant byte address 0x4 - core index']
  #allocation1 [shape = 'u32[144,128]{1,0:T(1,128)}', space=vmem, size = 0x12000, scoped, tag = 'internal scratch']
  #allocation2 [shape = 'f32[8,96]{1,0:T(8,128)}', space=vmem, size = 0x1000, scoped, tag = 'scratch operand']
  #allocation3 [shape = 'f32[8,32]{1,0:T(8,128)}', space=vmem, size = 0x1000, scoped, tag = 'scratch operand']
  %s0 = inlined_call_operand.hbm [shape: f32[2,8,32], index: 0, kind: input, shape index: {}]
  %s1 = inlined_call_operand.hbm [shape: f32[32,96], index: 1, kind: input, shape index: {}]
  %s2 = inlined_call_operand.vmem [shape: f32[1,96], index: 2, kind: input, shape index: {}]
  %s3 = inlined_call_operand.hbm [shape: f32[2,8,32], index: 3, kind: output, shape index: {0}]
  %s4 = inlined_call_operand.hbm [shape: f32[2,4,8,8], index: 4, kind: output, shape index: {1}]
  %5 = xla_tuple %s3, %s4
  %s6 = sld [smem:[#allocation0]]
  $region61: #{tpu_custom_call.1} parent=0
    _
  %s8 = ssub.s32 1, %s6
  %s9 = scalar_select 0, %s8, %s6
  $region1: #{tpu_custom_call.1} parent=0
    #allocation4 [shape = 'u8[8192]{0}', space=vmem, size = 0x2000, scoped, tag = 'input window, operand 0']
    #allocation5 [shape = 's32[2]{0}', space=sflag, size = 0x8, scoped, tag = 'scoped memory for tpu_custom_call.1']
    #allocation6 [shape = 's32[2]{0}', space=sflag, size = 0x8, scoped, tag = 'scoped memory for tpu_custom_call.1']
    #allocation7 [shape = 'u8[16384]{0}', space=vmem, size = 0x4000, scoped, tag = 'input window, operand 1, single buffered']
    #allocation8 [shape = 's32[1]{0}', space=sflag, size = 0x4, scoped, tag = 'scoped memory for tpu_custom_call.1']
    #allocation9 [shape = 'u8[8192]{0}', space=vmem, size = 0x2000, scoped, tag = 'output window, operand 0']
    #allocation10 [shape = 'u8[32768]{0}', space=vmem, size = 0x8000, scoped, tag = 'output window, operand 1']
    #allocation11 [shape = 's32[2]{0}', space=sflag, size = 0x8, scoped, tag = 'scoped memory for tpu_custom_call.1']
    %10 = vsyncpa [#allocation5], 0
    %s11 = scalar_lea.sflag [#allocation5], 1
    %12 = vsyncpa %s11, 0
    %13 = vsyncpa [#allocation8], 0
    %14 = vsyncpa [#allocation6], 0
    %s15 = scalar_lea.sflag [#allocation6], 1
    %16 = vsyncpa %s15, 0
    %17 = vsyncpa [#allocation11], 0
    %s18 = scalar_lea.sflag [#allocation11], 1
    %19 = vsyncpa %s18, 0
    loop: start=0, step=1, limit=4
    $region2: #{tpu_custom_call.1} parent=1 // loop_pre_header
      _
    $region3: #{tpu_custom_call.1} parent=1 // loop_header
      %s21 = sphi 0, %s25
      %p22 = scmp.ge.s32.totalorder %s21, 4
      %s31 = sphi 0, %s33
      %s34 = sphi 0, %s31
      %s35 = sphi 0, %s34
      %s51 = sphi 0, %s35
      %s55 = sphi 0, %s55
      %s57 = sphi 0, %s55
      %s58 = sphi 0, %s57
      %s72 = sphi 0, %s58
      %s76 = sphi 0, %s76
      %s78 = sphi 0, %s76
      %s79 = sphi 0, %s78
      %s93 = sphi 0, %s79
      %s99 = sphi 0, %s101
      %s102 = sphi 0, %s99
      %s103 = sphi 0, %s102
      %s119 = sphi 0, %s103
      %s125 = sphi 0, %s127
      %s128 = sphi 0, %s125
      %s129 = sphi 0, %s128
      %s145 = sphi 0, %s129
    $region4: #{tpu_custom_call.1} parent=1 // loop_header_branch
      %24 = sbr.rel (%p22) target = $region8
    $region5: #{tpu_custom_call.1} parent=1 // loop_body
      %s26 = ssub.s32 %s21, 1
      %s27 = ssub.s32 %s21, 2
      %s28 = sadd.s32 %s21, 1
      %s29 = ssub.s32 %s21, %s28
      %p30 = scmp.eq.s32.totalorder %s29, 0
      %s32 = sadd.s32 %s31, 1
      %s33 = scalar_select %p30, %s31, %s32
      %p36 = pneg %p30
      %p37 = scmp.eq.s32.totalorder %s21, 1
      %p38 = por %p36, %p37
      %p39 = scmp.ne.s32.totalorder %s31, %s34
      %p40 = scmp.eq.s32.totalorder %s21, 0
      %p41 = por %p39, %p40
      %p42 = scmp.ne.s32.totalorder %s31, %s34
      %p43 = scmp.eq.s32.totalorder %s26, 1
      %p44 = por %p42, %p43
      %p45 = scmp.ne.s32.totalorder %s34, %s35
      %p46 = scmp.eq.s32.totalorder %s26, 0
      %p47 = por %p45, %p46
      %p48 = scmp.ne.s32.totalorder %s34, %s35
      %p49 = scmp.eq.s32.totalorder %s27, 1
      %p50 = por %p48, %p49
      %p52 = scmp.ne.s32.totalorder %s35, %s51
      %p53 = scmp.eq.s32.totalorder %s27, 0
      %p54 = por %p52, %p53
      %s56 = sadd.s32 %s55, 1
      %p59 = scmp.eq.s32.totalorder %s21, 1
      %p60 = scmp.ne.s32.totalorder %s55, %s57
      %p61 = scmp.eq.s32.totalorder %s21, 0
      %p62 = por %p60, %p61
      %p63 = scmp.ne.s32.totalorder %s55, %s57
      %p64 = scmp.eq.s32.totalorder %s26, 1
      %p65 = por %p63, %p64
      %p66 = scmp.ne.s32.totalorder %s57, %s58
      %p67 = scmp.eq.s32.totalorder %s26, 0
      %p68 = por %p66, %p67
      %p69 = scmp.ne.s32.totalorder %s57, %s58
      %p70 = scmp.eq.s32.totalorder %s27, 1
      %p71 = por %p69, %p70
      %p73 = scmp.ne.s32.totalorder %s58, %s72
      %p74 = scmp.eq.s32.totalorder %s27, 0
      %p75 = por %p73, %p74
      %s77 = sadd.s32 %s76, 1
      %p80 = scmp.eq.s32.totalorder %s21, 1
      %p81 = scmp.ne.s32.totalorder %s76, %s78
      %p82 = scmp.eq.s32.totalorder %s21, 0
      %p83 = por %p81, %p82
      %p84 = scmp.ne.s32.totalorder %s76, %s78
      %p85 = scmp.eq.s32.totalorder %s26, 1
      %p86 = por %p84, %p85
      %p87 = scmp.ne.s32.totalorder %s78, %s79
      %p88 = scmp.eq.s32.totalorder %s26, 0
      %p89 = por %p87, %p88
      %p90 = scmp.ne.s32.totalorder %s78, %s79
      %p91 = scmp.eq.s32.totalorder %s27, 1
      %p92 = por %p90, %p91
      %p94 = scmp.ne.s32.totalorder %s79, %s93
      %p95 = scmp.eq.s32.totalorder %s27, 0
      %p96 = por %p94, %p95
      %s97 = ssub.s32 %s21, %s28
      %p98 = scmp.eq.s32.totalorder %s97, 0
      %s100 = sadd.s32 %s99, 1
      %s101 = scalar_select %p98, %s99, %s100
      %p104 = pneg %p98
      %p105 = scmp.eq.s32.totalorder %s21, 1
      %p106 = por %p104, %p105
      %p107 = scmp.ne.s32.totalorder %s99, %s102
      %p108 = scmp.eq.s32.totalorder %s21, 0
      %p109 = por %p107, %p108
      %p110 = scmp.ne.s32.totalorder %s99, %s102
      %p111 = scmp.eq.s32.totalorder %s26, 1
      %p112 = por %p110, %p111
      %p113 = scmp.ne.s32.totalorder %s102, %s103
      %p114 = scmp.eq.s32.totalorder %s26, 0
      %p115 = por %p113, %p114
      %p116 = scmp.ne.s32.totalorder %s102, %s103
      %p117 = scmp.eq.s32.totalorder %s27, 1
      %p118 = por %p116, %p117
      %p120 = scmp.ne.s32.totalorder %s103, %s119
      %p121 = scmp.eq.s32.totalorder %s27, 0
      %p122 = por %p120, %p121
      %s123 = ssub.s32 %s21, %s28
      %p124 = scmp.eq.s32.totalorder %s123, 0
      %s126 = sadd.s32 %s125, 1
      %s127 = scalar_select %p124, %s125, %s126
      %p130 = pneg %p124
      %p131 = scmp.eq.s32.totalorder %s21, 1
      %p132 = por %p130, %p131
      %p133 = scmp.ne.s32.totalorder %s125, %s128
      %p134 = scmp.eq.s32.totalorder %s21, 0
      %p135 = por %p133, %p134
      %p136 = scmp.ne.s32.totalorder %s125, %s128
      %p137 = scmp.eq.s32.totalorder %s26, 1
      %p138 = por %p136, %p137
      %p139 = scmp.ne.s32.totalorder %s128, %s129
      %p140 = scmp.eq.s32.totalorder %s26, 0
      %p141 = por %p139, %p140
      %p142 = scmp.ne.s32.totalorder %s128, %s129
      %p143 = scmp.eq.s32.totalorder %s27, 1
      %p144 = por %p142, %p143
      %p146 = scmp.ne.s32.totalorder %s129, %s145
      %p147 = scmp.eq.s32.totalorder %s27, 0
      %p148 = por %p146, %p147
      %p149 = scmp.le.s32.totalorder 1, %s21
      %p150 = scmp.lt.s32.totalorder %s21, 3
      %p151 = pnand %p149, %p150
      %p152 = pneg %p151
      // Predicated region
      $region9: #{tpu_custom_call.1} parent=5 // pred_check
        _
      $region10: #{tpu_custom_call.1} parent=5 // pred_check_branch
        %154 = sbr.rel (%p151) target = $region12
      $region11: #{tpu_custom_call.1} parent=5 // pred_region
        %s155 = ssub.s32 %s21, 1
        // Predicated region
        $region13: #{tpu_custom_call.1} parent=11 // pred_check
          %p156 = pneg %p68
        $region14: #{tpu_custom_call.1} parent=11 // pred_check_branch
          %158 = sbr.rel (%p156) target = $region16
        $region15: #{tpu_custom_call.1} parent=11 // pred_region
          %s160 = ssub.s32 512, 512
          %161 = vsyncadd [#allocation8], %s160
          %s162 = sshll.u32 [#allocation7], 4
          %s163 = int_to_ptr.vmem [resolvable:$true] %s162
          %168 = dma.hbm_to_vmem [thread:$0]  %s1, 512, %s163, [#allocation8], 128, 128, 8
        $region16: #{tpu_custom_call.1} parent=11 // pred_fallthru
          _
        // Predicated region
        $region17: #{tpu_custom_call.1} parent=11 // pred_check
          %p169 = pneg %p89
        $region18: #{tpu_custom_call.1} parent=11 // pred_check_branch
          %171 = sbr.rel (%p169) target = $region20
        $region19: #{tpu_custom_call.1} parent=11 // pred_region
          _
        $region20: #{tpu_custom_call.1} parent=11 // pred_fallthru
          _
      $region12: #{tpu_custom_call.1} parent=5 // pred_fallthru
        _
      %p172 = scmp.lt.s32.totalorder %s21, 2
      // Predicated region
      $region21: #{tpu_custom_call.1} parent=5 // pred_check
        %p173 = pneg %p172
      $region22: #{tpu_custom_call.1} parent=5 // pred_check_branch
        %175 = sbr.rel (%p173) target = $region24
      $region23: #{tpu_custom_call.1} parent=5 // pred_region
        // Predicated region
        $region25: #{tpu_custom_call.1} parent=23 // pred_check
          %p176 = pneg %p41
        $region26: #{tpu_custom_call.1} parent=23 // pred_check_branch
          %178 = sbr.rel (%p176) target = $region28
        $region27: #{tpu_custom_call.1} parent=23 // pred_region
          %s179 = sand.u32 %s31, 1
          %s180 = scalar_lea.sflag [#allocation5], %s179
          %s181 = sand.u32 %s31, 1
          %s182 = smul.addr %s181, 8
          %s183 = scalar_lea.vmem [#allocation4], %s182
          %s185 = ssub.s32 128, 128
          %186 = vsyncadd %s180, %s185
          %s187 = smul.addr %s21, 128
          %s188 = scalar_lea.hbm %s0, %s187
          %s190 = sshll.u32 %s183, 4
          %s191 = int_to_ptr.vmem [resolvable:$true] %s190
          %193 = dma.hbm_to_vmem [thread:$0]  %s188, 128, %s191, %s180
        $region28: #{tpu_custom_call.1} parent=23 // pred_fallthru
          _
      $region24: #{tpu_custom_call.1} parent=5 // pred_fallthru
        _
      %p194 = scmp.le.s32.totalorder 1, %s21
      %p195 = scmp.lt.s32.totalorder %s21, 3
      %p196 = pnand %p194, %p195
      %p197 = pneg %p196
      // Predicated region
      $region29: #{tpu_custom_call.1} parent=5 // pred_check
        _
      $region30: #{tpu_custom_call.1} parent=5 // pred_check_branch
        %199 = sbr.rel (%p196) target = $region32
      $region31: #{tpu_custom_call.1} parent=5 // pred_region
        %s200 = ssub.s32 %s21, 1
        %s201 = sand.u32 %s34, 1
        %s202 = scalar_lea.sflag [#allocation5], %s201
        %s203 = sand.u32 %s34, 1
        %s204 = smul.addr %s203, 8
        %s205 = scalar_lea.vmem [#allocation4], %s204
        // Predicated region
        $region33: #{tpu_custom_call.1} parent=31 // pred_check
          %p206 = pneg %p47
        $region34: #{tpu_custom_call.1} parent=31 // pred_check_branch
          %208 = sbr.rel (%p206) target = $region36
        $region35: #{tpu_custom_call.1} parent=31 // pred_region
          %209 = dma.done %s202, 128
        $region36: #{tpu_custom_call.1} parent=31 // pred_fallthru
          _
        // Predicated region
        $region37: #{tpu_custom_call.1} parent=31 // pred_check
          %p210 = pneg %p68
        $region38: #{tpu_custom_call.1} parent=31 // pred_check_branch
          %212 = sbr.rel (%p210) target = $region40
        $region39: #{tpu_custom_call.1} parent=31 // pred_region
          %213 = dma.done [#allocation8], 512
        $region40: #{tpu_custom_call.1} parent=31 // pred_fallthru
          _
        %s214 = sand.u32 %s34, 1
        %s215 = scalar_lea.sflag [#allocation5], %s214
        %s216 = sand.u32 %s34, 1
        %s217 = smul.addr %s216, 8
        %s218 = scalar_lea.vmem [#allocation4], %s217
        %p219 = pneg %p47
        %p220 = pneg %p44
        %p221 = pneg %p68
        %p222 = pneg %p65
        %p223 = pneg %p89
        %p224 = pneg %p86
        %p225 = pneg %p115
        %p226 = pneg %p112
        %s227 = sand.u32 %s102, 1
        %s228 = scalar_lea.sflag [#allocation6], %s227
        %s229 = sand.u32 %s102, 1
        %s230 = smul.addr %s229, 8
        %s231 = scalar_lea.vmem [#allocation9], %s230
        %p232 = pneg %p141
        %p233 = pneg %p138
        %s234 = sand.u32 %s128, 1
        %s235 = scalar_lea.sflag [#allocation11], %s234
        %s236 = sand.u32 %s128, 1
        %s237 = smul.addr %s236, 32
        %s238 = scalar_lea.vmem [#allocation10], %s237
        %v239 = vld [vmem:[%s205] sm:$0xff]
        %v240 = vld [vmem:[#allocation7] sm:$0xff]
        %v241 = vld [vmem:[#allocation7 + $0x8] sm:$0xff]
        %v242 = vld [vmem:[#allocation7 + $0x10] sm:$0xff]
        %v243 = vld [vmem:[#allocation7 + $0x18] sm:$0xff]
        %v244 = vld [vmem:[%s2] sm:$0x1]
        %v246 = vlaneseq
        %v247 = vshrl.u32 %v246, 7
        %v248 = vsub.s32 0, %v247
        %v249 = vrot.slane %v244, %v248
        %vm251 = vcmask 261120
        %v253 = vsel %vm251, %v239, 0
        %255 = vmatprep.subr.mxu0 0.0
        %256 = vmatpush1.msra.mxu0 %v240
        %257 = vmatprep.subr.mxu0 0.0
        %258 = vmatpush1.msra.mxu0 %v241
        %259 = vmatprep.subr.mxu0 0.0
        %260 = vmatpush1.msra.mxu0 %v242
        %261 = vmatprep.subr.mxu0 0.0
        %262 = vmatpush1.msra.mxu0 %v243
        %263 = vmatprep.subr.mxu0 0.0
        %264 = vmatpush1.msra.mxu0 0.0
        %265 = vmatprep.subr.mxu0 0.0
        %266 = vmatpush1.msra.mxu0 0.0
        %267 = vmatprep.subr.mxu0 0.0
        %268 = vmatpush1.msra.mxu0 0.0
        %269 = vmatprep.subr.mxu0 0.0
        %270 = vmatpush1.msra.mxu0 0.0
        %271 = vmatprep.subr.mxu0 0.0
        %272 = vmatpush1.msra.mxu0 0.0
        %273 = vmatprep.subr.mxu0 0.0
        %274 = vmatpush1.msra.mxu0 0.0
        %275 = vmatprep.subr.mxu0 0.0
        %276 = vmatpush1.msra.mxu0 0.0
        %277 = vmatprep.subr.mxu0 0.0
        %278 = vmatpush1.msra.mxu0 0.0
        %279 = vmatprep.subr.mxu0 0.0
        %280 = vmatpush1.msra.mxu0 0.0
        %281 = vmatprep.subr.mxu0 0.0
        %282 = vmatpush1.msra.mxu0 0.0
        %283 = vmatprep.subr.mxu0 0.0
        %284 = vmatpush1.msra.mxu0 0.0
        %285 = vmatprep.subr.mxu0 0.0
        %286 = vmatpush1.msra.mxu0 0.0
        %287 = vmatprep.subr.mxu0 0.0
        %288 = vmatpush1.msra.mxu0 0.0
        %289 = vmatprep.subr.mxu0 0.0
        %290 = vmatpush1.msra.mxu0 0.0
        %291 = vmatprep.subr.mxu0 0.0
        %292 = vmatpush1.msra.mxu0 0.0
        %293 = vmatprep.subr.mxu0 0.0
        %294 = vmatpush1.msra.mxu0 0.0
        %295 = vmatprep.subr.mxu0 0.0
        %296 = vmatpush1.msra.mxu0 0.0
        %297 = vmatprep.subr.mxu0 0.0
        %298 = vmatpush1.msra.mxu0 0.0
        %299 = vmatprep.subr.mxu0 0.0
        %300 = vmatpush1.msra.mxu0 0.0
        %301 = vmatprep.subr.mxu0 0.0
        %302 = vmatpush1.msra.mxu0 0.0
        %303 = vmatprep.subr.mxu0 0.0
        %304 = vmatpush1.msra.mxu0 0.0
        %305 = vmatprep.subr.mxu0 0.0
        %306 = vmatpush1.msra.mxu0 0.0
        %307 = vmatprep.subr.mxu0 0.0
        %308 = vmatpush1.msra.mxu0 0.0
        %309 = vmatprep.subr.mxu0 0.0
        %310 = vmatpush1.msra.mxu0 0.0
        %311 = vmatprep.subr.mxu0 0.0
        %312 = vmatpush1.msra.mxu0 0.0
        %313 = vmatprep.subr.mxu0 0.0
        %314 = vmatpush1.msra.mxu0 0.0
        %315 = vmatprep.subr.mxu0 0.0
        %316 = vmatpush1.msra.mxu0 0.0
        %317 = vmatprep.subr.mxu0 0.0
        %318 = vmatpush1.msra.mxu0 0.0
        %319 = vmatprep.mubr.f32.mxu0 0.0
        %320 = vmatmul.mubr.f32.gmra.mrb[0].mxu0 %v253
        %v321 = vpop.f32.mrb[0].mxu0
        %v322 = vadd.f32 %v249, %v321
        %v323 = vpop.f32.mrb[0].mxu0
        %324 = vdwg.mxu0
        %vm325 = vcmask 785408
        %326 = vst.msk [vmem:[#allocation2] sm:$0xff] %vm325, %v322
        %v327 = vld [vmem:[#allocation2] sm:$0xff]
        %329 = vrot.lane.b32.xlu0 %v327, 96
        %v330 = vpop.permute.xlu0 %329
        %vm331 = vcmask 64512
        %v332 = vsel %vm331, %v327, 0
        %v334 = vsel %vm331, %v330, 0
        %336 = vmatprep.subr.mxu0 0.0
        %337 = vmatpush1.xpose.msra.mxu0 %v334
        %338 = vmatprep.subr.mxu0 0.0
        %339 = vmatpush1.xpose.msra.mxu0 0.0
        %340 = vmatprep.subr.mxu0 0.0
        %341 = vmatpush1.xpose.msra.mxu0 0.0
        %342 = vmatprep.subr.mxu0 0.0
        %343 = vmatpush1.xpose.msra.mxu0 0.0
        %344 = vmatprep.subr.mxu0 0.0
        %345 = vmatpush1.xpose.msra.mxu0 0.0
        %346 = vmatprep.subr.mxu0 0.0
        %347 = vmatpush1.xpose.msra.mxu0 0.0
        %348 = vmatprep.subr.mxu0 0.0
        %349 = vmatpush1.xpose.msra.mxu0 0.0
        %350 = vmatprep.subr.mxu0 0.0
        %351 = vmatpush1.xpose.msra.mxu0 0.0
        %352 = vmatprep.subr.mxu0 0.0
        %353 = vmatpush1.xpose.msra.mxu0 0.0
        %354 = vmatprep.subr.mxu0 0.0
        %355 = vmatpush1.xpose.msra.mxu0 0.0
        %356 = vmatprep.subr.mxu0 0.0
        %357 = vmatpush1.xpose.msra.mxu0 0.0
        %358 = vmatprep.subr.mxu0 0.0
        %359 = vmatpush1.xpose.msra.mxu0 0.0
        %360 = vmatprep.subr.mxu0 0.0
        %361 = vmatpush1.xpose.msra.mxu0 0.0
        %362 = vmatprep.subr.mxu0 0.0
        %363 = vmatpush1.xpose.msra.mxu0 0.0
        %364 = vmatprep.subr.mxu0 0.0
        %365 = vmatpush1.xpose.msra.mxu0 0.0
        %366 = vmatprep.subr.mxu0 0.0
        %367 = vmatpush1.xpose.msra.mxu0 0.0
        %368 = vmatprep.subr.mxu0 0.0
        %369 = vmatpush1.xpose.msra.mxu0 0.0
        %370 = vmatprep.subr.mxu0 0.0
        %371 = vmatpush1.xpose.msra.mxu0 0.0
        %372 = vmatprep.subr.mxu0 0.0
        %373 = vmatpush1.xpose.msra.mxu0 0.0
        %374 = vmatprep.subr.mxu0 0.0
        %375 = vmatpush1.xpose.msra.mxu0 0.0
        %376 = vmatprep.subr.mxu0 0.0
        %377 = vmatpush1.xpose.msra.mxu0 0.0
        %378 = vmatprep.subr.mxu0 0.0
        %379 = vmatpush1.xpose.msra.mxu0 0.0
        %380 = vmatprep.subr.mxu0 0.0
        %381 = vmatpush1.xpose.msra.mxu0 0.0
        %382 = vmatprep.subr.mxu0 0.0
        %383 = vmatpush1.xpose.msra.mxu0 0.0
        %384 = vmatprep.subr.mxu0 0.0
        %385 = vmatpush1.xpose.msra.mxu0 0.0
        %386 = vmatprep.subr.mxu0 0.0
        %387 = vmatpush1.xpose.msra.mxu0 0.0
        %388 = vmatprep.subr.mxu0 0.0
        %389 = vmatpush1.xpose.msra.mxu0 0.0
        %390 = vmatprep.subr.mxu0 0.0
        %391 = vmatpush1.xpose.msra.mxu0 0.0
        %392 = vmatprep.subr.mxu0 0.0
        %393 = vmatpush1.xpose.msra.mxu0 0.0
        %394 = vmatprep.subr.mxu0 0.0
        %395 = vmatpush1.xpose.msra.mxu0 0.0
        %396 = vmatprep.subr.mxu0 0.0
        %397 = vmatpush1.xpose.msra.mxu0 0.0
        %398 = vmatprep.subr.mxu0 0.0
        %399 = vmatpush1.xpose.msra.mxu0 0.0
        %400 = vmatprep.mubr.f32.mxu0 0.0
        %401 = vmatmul.mubr.f32.gmra.mrb[0].mxu0 %v332
        %v402 = vpop.f32.mrb[0].mxu0
        %v403 = vadd.f32 0.0, %v402
        %v404 = vpop.f32.mrb[0].mxu0
        %405 = vdwg.mxu0
        %v406 = vsel %vm331, %v403, -inf
        %407 = vmax.xlane.f32.xlu0 %v406
        %v408 = vpop.xlane.xlu0 %407
        %v409 = vsub.f32 %v403, %v408
        %v410 = vmul.f32 %v409, 1.442695
        %v411 = vpow.pop %v410
        %v412 = vsel %vm331, %v411, 0.0
        %413 = vadd.xlane.f32.xlu0 %v412
        %v414 = vpop.xlane.xlu0 %413
        %v415 = vrcp.pop %v414
        %v416 = vmul.f32 %v411, %v415
        %417 = vst.msk [vmem:[%s238] sm:$0xff] %vm331, %v416
        %418 = vrot.lane.b32.xlu0 %v327, 64
        %v419 = vpop.permute.xlu0 %418
        %v422 = vsel %vm331, %v416, 0
        %424 = vmatprep.subr.mxu0 0.0
        %425 = vmatpush1.msra.mxu0 %v419
        %426 = vmatprep.subr.mxu0 0.0
        %427 = vmatpush1.msra.mxu0 0.0
        %428 = vmatprep.subr.mxu0 0.0
        %429 = vmatpush1.msra.mxu0 0.0
        %430 = vmatprep.subr.mxu0 0.0
        %431 = vmatpush1.msra.mxu0 0.0
        %432 = vmatprep.subr.mxu0 0.0
        %433 = vmatpush1.msra.mxu0 0.0
        %434 = vmatprep.subr.mxu0 0.0
        %435 = vmatpush1.msra.mxu0 0.0
        %436 = vmatprep.subr.mxu0 0.0
        %437 = vmatpush1.msra.mxu0 0.0
        %438 = vmatprep.subr.mxu0 0.0
        %439 = vmatpush1.msra.mxu0 0.0
        %440 = vmatprep.subr.mxu0 0.0
        %441 = vmatpush1.msra.mxu0 0.0
        %442 = vmatprep.subr.mxu0 0.0
        %443 = vmatpush1.msra.mxu0 0.0
        %444 = vmatprep.subr.mxu0 0.0
        %445 = vmatpush1.msra.mxu0 0.0
        %446 = vmatprep.subr.mxu0 0.0
        %447 = vmatpush1.msra.mxu0 0.0
        %448 = vmatprep.subr.mxu0 0.0
        %449 = vmatpush1.msra.mxu0 0.0
        %450 = vmatprep.subr.mxu0 0.0
        %451 = vmatpush1.msra.mxu0 0.0
        %452 = vmatprep.subr.mxu0 0.0
        %453 = vmatpush1.msra.mxu0 0.0
        %454 = vmatprep.subr.mxu0 0.0
        %455 = vmatpush1.msra.mxu0 0.0
        %456 = vmatprep.subr.mxu0 0.0
        %457 = vmatpush1.msra.mxu0 0.0
        %458 = vmatprep.subr.mxu0 0.0
        %459 = vmatpush1.msra.mxu0 0.0
        %460 = vmatprep.subr.mxu0 0.0
        %461 = vmatpush1.msra.mxu0 0.0
        %462 = vmatprep.subr.mxu0 0.0
        %463 = vmatpush1.msra.mxu0 0.0
        %464 = vmatprep.subr.mxu0 0.0
        %465 = vmatpush1.msra.mxu0 0.0
        %466 = vmatprep.subr.mxu0 0.0
        %467 = vmatpush1.msra.mxu0 0.0
        %468 = vmatprep.subr.mxu0 0.0
        %469 = vmatpush1.msra.mxu0 0.0
        %470 = vmatprep.subr.mxu0 0.0
        %471 = vmatpush1.msra.mxu0 0.0
        %472 = vmatprep.subr.mxu0 0.0
        %473 = vmatpush1.msra.mxu0 0.0
        %474 = vmatprep.subr.mxu0 0.0
        %475 = vmatpush1.msra.mxu0 0.0
        %476 = vmatprep.subr.mxu0 0.0
        %477 = vmatpush1.msra.mxu0 0.0
        %478 = vmatprep.subr.mxu0 0.0
        %479 = vmatpush1.msra.mxu0 0.0
        %480 = vmatprep.subr.mxu0 0.0
        %481 = vmatpush1.msra.mxu0 0.0
        %482 = vmatprep.subr.mxu0 0.0
        %483 = vmatpush1.msra.mxu0 0.0
        %484 = vmatprep.subr.mxu0 0.0
        %485 = vmatpush1.msra.mxu0 0.0
        %486 = vmatprep.subr.mxu0 0.0
        %487 = vmatpush1.msra.mxu0 0.0
        %488 = vmatprep.mubr.f32.mxu0 0.0
        %489 = vmatmul.mubr.f32.gmra.mrb[0].mxu0 %v422
        %v490 = vpop.f32.mrb[0].mxu0
        %v491 = vadd.f32 0.0, %v490
        %v492 = vpop.f32.mrb[0].mxu0
        %493 = vdwg.mxu0
        %494 = vst.msk [vmem:[#allocation3] sm:$0xff] %vm331, %v491
        %v495 = vld [vmem:[#allocation2] sm:$0xff]
        %497 = vrot.lane.b32.xlu0 %v495, 120
        %v498 = vpop.permute.xlu0 %497
        %499 = vrot.lane.b32.xlu0 %v495, 88
        %v500 = vpop.permute.xlu0 %499
        %v501 = vsel %vm331, %v498, 0
        %v503 = vsel %vm331, %v500, 0
        %505 = vmatprep.subr.mxu0 0.0
        %506 = vmatpush1.xpose.msra.mxu0 %v503
        %507 = vmatprep.subr.mxu0 0.0
        %508 = vmatpush1.xpose.msra.mxu0 0.0
        %509 = vmatprep.subr.mxu0 0.0
        %510 = vmatpush1.xpose.msra.mxu0 0.0
        %511 = vmatprep.subr.mxu0 0.0
        %512 = vmatpush1.xpose.msra.mxu0 0.0
        %513 = vmatprep.subr.mxu0 0.0
        %514 = vmatpush1.xpose.msra.mxu0 0.0
        %515 = vmatprep.subr.mxu0 0.0
        %516 = vmatpush1.xpose.msra.mxu0 0.0
        %517 = vmatprep.subr.mxu0 0.0
        %518 = vmatpush1.xpose.msra.mxu0 0.0
        %519 = vmatprep.subr.mxu0 0.0
        %520 = vmatpush1.xpose.msra.mxu0 0.0
        %521 = vmatprep.subr.mxu0 0.0
        %522 = vmatpush1.xpose.msra.mxu0 0.0
        %523 = vmatprep.subr.mxu0 0.0
        %524 = vmatpush1.xpose.msra.mxu0 0.0
        %525 = vmatprep.subr.mxu0 0.0
        %526 = vmatpush1.xpose.msra.mxu0 0.0
        %527 = vmatprep.subr.mxu0 0.0
        %528 = vmatpush1.xpose.msra.mxu0 0.0
        %529 = vmatprep.subr.mxu0 0.0
        %530 = vmatpush1.xpose.msra.mxu0 0.0
        %531 = vmatprep.subr.mxu0 0.0
        %532 = vmatpush1.xpose.msra.mxu0 0.0
        %533 = vmatprep.subr.mxu0 0.0
        %534 = vmatpush1.xpose.msra.mxu0 0.0
        %535 = vmatprep.subr.mxu0 0.0
        %536 = vmatpush1.xpose.msra.mxu0 0.0
        %537 = vmatprep.subr.mxu0 0.0
        %538 = vmatpush1.xpose.msra.mxu0 0.0
        %539 = vmatprep.subr.mxu0 0.0
        %540 = vmatpush1.xpose.msra.mxu0 0.0
        %541 = vmatprep.subr.mxu0 0.0
        %542 = vmatpush1.xpose.msra.mxu0 0.0
        %543 = vmatprep.subr.mxu0 0.0
        %544 = vmatpush1.xpose.msra.mxu0 0.0
        %545 = vmatprep.subr.mxu0 0.0
        %546 = vmatpush1.xpose.msra.mxu0 0.0
        %547 = vmatprep.subr.mxu0 0.0
        %548 = vmatpush1.xpose.msra.mxu0 0.0
        %549 = vmatprep.subr.mxu0 0.0
        %550 = vmatpush1.xpose.msra.mxu0 0.0
        %551 = vmatprep.subr.mxu0 0.0
        %552 = vmatpush1.xpose.msra.mxu0 0.0
        %553 = vmatprep.subr.mxu0 0.0
        %554 = vmatpush1.xpose.msra.mxu0 0.0
        %555 = vmatprep.subr.mxu0 0.0
        %556 = vmatpush1.xpose.msra.mxu0 0.0
        %557 = vmatprep.subr.mxu0 0.0
        %558 = vmatpush1.xpose.msra.mxu0 0.0
        %559 = vmatprep.subr.mxu0 0.0
        %560 = vmatpush1.xpose.msra.mxu0 0.0
        %561 = vmatprep.subr.mxu0 0.0
        %562 = vmatpush1.xpose.msra.mxu0 0.0
        %563 = vmatprep.subr.mxu0 0.0
        %564 = vmatpush1.xpose.msra.mxu0 0.0
        %565 = vmatprep.subr.mxu0 0.0
        %566 = vmatpush1.xpose.msra.mxu0 0.0
        %567 = vmatprep.subr.mxu0 0.0
        %568 = vmatpush1.xpose.msra.mxu0 0.0
        %569 = vmatprep.mubr.f32.mxu0 0.0
        %570 = vmatmul.mubr.f32.gmra.mrb[0].mxu0 %v501
        %v571 = vpop.f32.mrb[0].mxu0
        %v572 = vadd.f32 0.0, %v571
        %v573 = vpop.f32.mrb[0].mxu0
        %574 = vdwg.mxu0
        %v575 = vsel %vm331, %v572, -inf
        %576 = vmax.xlane.f32.xlu0 %v575
        %v577 = vpop.xlane.xlu0 %576
        %v578 = vsub.f32 %v572, %v577
        %v579 = vmul.f32 %v578, 1.442695
        %v580 = vpow.pop %v579
        %v581 = vsel %vm331, %v580, 0.0
        %582 = vadd.xlane.f32.xlu0 %v581
        %v583 = vpop.xlane.xlu0 %582
        %v584 = vrcp.pop %v583
        %v585 = vmul.f32 %v580, %v584
        %s586 = scalar_lea.vmem %s238, 8 [#allocation10]
        %587 = vst.msk [vmem:[%s586] sm:$0xff] %vm331, %v585
        %588 = vrot.lane.b32.xlu0 %v495, 56
        %v589 = vpop.permute.xlu0 %588
        %v592 = vsel %vm331, %v585, 0
        %594 = vmatprep.subr.mxu0 0.0
        %595 = vmatpush1.msra.mxu0 %v589
        %596 = vmatprep.subr.mxu0 0.0
        %597 = vmatpush1.msra.mxu0 0.0
        %598 = vmatprep.subr.mxu0 0.0
        %599 = vmatpush1.msra.mxu0 0.0
        %600 = vmatprep.subr.mxu0 0.0
        %601 = vmatpush1.msra.mxu0 0.0
        %602 = vmatprep.subr.mxu0 0.0
        %603 = vmatpush1.msra.mxu0 0.0
        %604 = vmatprep.subr.mxu0 0.0
        %605 = vmatpush1.msra.mxu0 0.0
        %606 = vmatprep.subr.mxu0 0.0
        %607 = vmatpush1.msra.mxu0 0.0
        %608 = vmatprep.subr.mxu0 0.0
        %609 = vmatpush1.msra.mxu0 0.0
        %610 = vmatprep.subr.mxu0 0.0
        %611 = vmatpush1.msra.mxu0 0.0
        %612 = vmatprep.subr.mxu0 0.0
        %613 = vmatpush1.msra.mxu0 0.0
        %614 = vmatprep.subr.mxu0 0.0
        %615 = vmatpush1.msra.mxu0 0.0
        %616 = vmatprep.subr.mxu0 0.0
        %617 = vmatpush1.msra.mxu0 0.0
        %618 = vmatprep.subr.mxu0 0.0
        %619 = vmatpush1.msra.mxu0 0.0
        %620 = vmatprep.subr.mxu0 0.0
        %621 = vmatpush1.msra.mxu0 0.0
        %622 = vmatprep.subr.mxu0 0.0
        %623 = vmatpush1.msra.mxu0 0.0
        %624 = vmatprep.subr.mxu0 0.0
        %625 = vmatpush1.msra.mxu0 0.0
        %626 = vmatprep.subr.mxu0 0.0
        %627 = vmatpush1.msra.mxu0 0.0
        %628 = vmatprep.subr.mxu0 0.0
        %629 = vmatpush1.msra.mxu0 0.0
        %630 = vmatprep.subr.mxu0 0.0
        %631 = vmatpush1.msra.mxu0 0.0
        %632 = vmatprep.subr.mxu0 0.0
        %633 = vmatpush1.msra.mxu0 0.0
        %634 = vmatprep.subr.mxu0 0.0
        %635 = vmatpush1.msra.mxu0 0.0
        %636 = vmatprep.subr.mxu0 0.0
        %637 = vmatpush1.msra.mxu0 0.0
        %638 = vmatprep.subr.mxu0 0.0
        %639 = vmatpush1.msra.mxu0 0.0
        %640 = vmatprep.subr.mxu0 0.0
        %641 = vmatpush1.msra.mxu0 0.0
        %642 = vmatprep.subr.mxu0 0.0
        %643 = vmatpush1.msra.mxu0 0.0
        %644 = vmatprep.subr.mxu0 0.0
        %645 = vmatpush1.msra.mxu0 0.0
        %646 = vmatprep.subr.mxu0 0.0
        %647 = vmatpush1.msra.mxu0 0.0
        %648 = vmatprep.subr.mxu0 0.0
        %649 = vmatpush1.msra.mxu0 0.0
        %650 = vmatprep.subr.mxu0 0.0
        %651 = vmatpush1.msra.mxu0 0.0
        %652 = vmatprep.subr.mxu0 0.0
        %653 = vmatpush1.msra.mxu0 0.0
        %654 = vmatprep.subr.mxu0 0.0
        %655 = vmatpush1.msra.mxu0 0.0
        %656 = vmatprep.subr.mxu0 0.0
        %657 = vmatpush1.msra.mxu0 0.0
        %658 = vmatprep.mubr.f32.mxu0 0.0
        %659 = vmatmul.mubr.f32.gmra.mrb[0].mxu0 %v592
        %v660 = vpop.f32.mrb[0].mxu0
        %v661 = vadd.f32 0.0, %v660
        %v662 = vpop.f32.mrb[0].mxu0
        %663 = vdwg.mxu0
        %665 = vrot.lane.b32.xlu0 %v661, 8
        %v666 = vpop.permute.xlu0 %665
        %vm668 = vcmask 130112
        %669 = vst.msk [vmem:[#allocation3] sm:$0xff] %vm668, %v666
        %v670 = vld [vmem:[#allocation2] sm:$0xff]
        %672 = vrot.lane.b32.xlu0 %v670, 112
        %v673 = vpop.permute.xlu0 %672
        %674 = vrot.lane.b32.xlu0 %v670, 80
        %v675 = vpop.permute.xlu0 %674
        %v676 = vsel %vm331, %v673, 0
        %v678 = vsel %vm331, %v675, 0
        %680 = vmatprep.subr.mxu0 0.0
        %681 = vmatpush1.xpose.msra.mxu0 %v678
        %682 = vmatprep.subr.mxu0 0.0
        %683 = vmatpush1.xpose.msra.mxu0 0.0
        %684 = vmatprep.subr.mxu0 0.0
        %685 = vmatpush1.xpose.msra.mxu0 0.0
        %686 = vmatprep.subr.mxu0 0.0
        %687 = vmatpush1.xpose.msra.mxu0 0.0
        %688 = vmatprep.subr.mxu0 0.0
        %689 = vmatpush1.xpose.msra.mxu0 0.0
        %690 = vmatprep.subr.mxu0 0.0
        %691 = vmatpush1.xpose.msra.mxu0 0.0
        %692 = vmatprep.subr.mxu0 0.0
        %693 = vmatpush1.xpose.msra.mxu0 0.0
        %694 = vmatprep.subr.mxu0 0.0
        %695 = vmatpush1.xpose.msra.mxu0 0.0
        %696 = vmatprep.subr.mxu0 0.0
        %697 = vmatpush1.xpose.msra.mxu0 0.0
        %698 = vmatprep.subr.mxu0 0.0
        %699 = vmatpush1.xpose.msra.mxu0 0.0
        %700 = vmatprep.subr.mxu0 0.0
        %701 = vmatpush1.xpose.msra.mxu0 0.0
        %702 = vmatprep.subr.mxu0 0.0
        %703 = vmatpush1.xpose.msra.mxu0 0.0
        %704 = vmatprep.subr.mxu0 0.0
        %705 = vmatpush1.xpose.msra.mxu0 0.0
        %706 = vmatprep.subr.mxu0 0.0
        %707 = vmatpush1.xpose.msra.mxu0 0.0
        %708 = vmatprep.subr.mxu0 0.0
        %709 = vmatpush1.xpose.msra.mxu0 0.0
        %710 = vmatprep.subr.mxu0 0.0
        %711 = vmatpush1.xpose.msra.mxu0 0.0
        %712 = vmatprep.subr.mxu0 0.0
        %713 = vmatpush1.xpose.msra.mxu0 0.0
        %714 = vmatprep.subr.mxu0 0.0
        %715 = vmatpush1.xpose.msra.mxu0 0.0
        %716 = vmatprep.subr.mxu0 0.0
        %717 = vmatpush1.xpose.msra.mxu0 0.0
        %718 = vmatprep.subr.mxu0 0.0
        %719 = vmatpush1.xpose.msra.mxu0 0.0
        %720 = vmatprep.subr.mxu0 0.0
        %721 = vmatpush1.xpose.msra.mxu0 0.0
        %722 = vmatprep.subr.mxu0 0.0
        %723 = vmatpush1.xpose.msra.mxu0 0.0
        %724 = vmatprep.subr.mxu0 0.0
        %725 = vmatpush1.xpose.msra.mxu0 0.0
        %726 = vmatprep.subr.mxu0 0.0
        %727 = vmatpush1.xpose.msra.mxu0 0.0
        %728 = vmatprep.subr.mxu0 0.0
        %729 = vmatpush1.xpose.msra.mxu0 0.0
        %730 = vmatprep.subr.mxu0 0.0
        %731 = vmatpush1.xpose.msra.mxu0 0.0
        %732 = vmatprep.subr.mxu0 0.0
        %733 = vmatpush1.xpose.msra.mxu0 0.0
        %734 = vmatprep.subr.mxu0 0.0
        %735 = vmatpush1.xpose.msra.mxu0 0.0
        %736 = vmatprep.subr.mxu0 0.0
        %737 = vmatpush1.xpose.msra.mxu0 0.0
        %738 = vmatprep.subr.mxu0 0.0
        %739 = vmatpush1.xpose.msra.mxu0 0.0
        %740 = vmatprep.subr.mxu0 0.0
        %741 = vmatpush1.xpose.msra.mxu0 0.0
        %742 = vmatprep.subr.mxu0 0.0
        %743 = vmatpush1.xpose.msra.mxu0 0.0
        %744 = vmatprep.mubr.f32.mxu0 0.0
        %745 = vmatmul.mubr.f32.gmra.mrb[0].mxu0 %v676
        %v746 = vpop.f32.mrb[0].mxu0
        %v747 = vadd.f32 0.0, %v746
        %v748 = vpop.f32.mrb[0].mxu0
        %749 = vdwg.mxu0
        %v750 = vsel %vm331, %v747, -inf
        %751 = vmax.xlane.f32.xlu0 %v750
        %v752 = vpop.xlane.xlu0 %751
        %v753 = vsub.f32 %v747, %v752
        %v754 = vmul.f32 %v753, 1.442695
        %v755 = vpow.pop %v754
        %v756 = vsel %vm331, %v755, 0.0
        %757 = vadd.xlane.f32.xlu0 %v756
        %v758 = vpop.xlane.xlu0 %757
        %v759 = vrcp.pop %v758
        %v760 = vmul.f32 %v755, %v759
        %s761 = scalar_lea.vmem %s238, 16 [#allocation10]
        %762 = vst.msk [vmem:[%s761] sm:$0xff] %vm331, %v760
        %763 = vrot.lane.b32.xlu0 %v670, 48
        %v764 = vpop.permute.xlu0 %763
        %v767 = vsel %vm331, %v760, 0
        %769 = vmatprep.subr.mxu0 0.0
        %770 = vmatpush1.msra.mxu0 %v764
        %771 = vmatprep.subr.mxu0 0.0
        %772 = vmatpush1.msra.mxu0 0.0
        %773 = vmatprep.subr.mxu0 0.0
        %774 = vmatpush1.msra.mxu0 0.0
        %775 = vmatprep.subr.mxu0 0.0
        %776 = vmatpush1.msra.mxu0 0.0
        %777 = vmatprep.subr.mxu0 0.0
        %778 = vmatpush1.msra.mxu0 0.0
        %779 = vmatprep.subr.mxu0 0.0
        %780 = vmatpush1.msra.mxu0 0.0
        %781 = vmatprep.subr.mxu0 0.0
        %782 = vmatpush1.msra.mxu0 0.0
        %783 = vmatprep.subr.mxu0 0.0
        %784 = vmatpush1.msra.mxu0 0.0
        %785 = vmatprep.subr.mxu0 0.0
        %786 = vmatpush1.msra.mxu0 0.0
        %787 = vmatprep.subr.mxu0 0.0
        %788 = vmatpush1.msra.mxu0 0.0
        %789 = vmatprep.subr.mxu0 0.0
        %790 = vmatpush1.msra.mxu0 0.0
        %791 = vmatprep.subr.mxu0 0.0
        %792 = vmatpush1.msra.mxu0 0.0
        %793 = vmatprep.subr.mxu0 0.0
        %794 = vmatpush1.msra.mxu0 0.0
        %795 = vmatprep.subr.mxu0 0.0
        %796 = vmatpush1.msra.mxu0 0.0
        %797 = vmatprep.subr.mxu0 0.0
        %798 = vmatpush1.msra.mxu0 0.0
        %799 = vmatprep.subr.mxu0 0.0
        %800 = vmatpush1.msra.mxu0 0.0
        %801 = vmatprep.subr.mxu0 0.0
        %802 = vmatpush1.msra.mxu0 0.0
        %803 = vmatprep.subr.mxu0 0.0
        %804 = vmatpush1.msra.mxu0 0.0
        %805 = vmatprep.subr.mxu0 0.0
        %806 = vmatpush1.msra.mxu0 0.0
        %807 = vmatprep.subr.mxu0 0.0
        %808 = vmatpush1.msra.mxu0 0.0
        %809 = vmatprep.subr.mxu0 0.0
        %810 = vmatpush1.msra.mxu0 0.0
        %811 = vmatprep.subr.mxu0 0.0
        %812 = vmatpush1.msra.mxu0 0.0
        %813 = vmatprep.subr.mxu0 0.0
        %814 = vmatpush1.msra.mxu0 0.0
        %815 = vmatprep.subr.mxu0 0.0
        %816 = vmatpush1.msra.mxu0 0.0
        %817 = vmatprep.subr.mxu0 0.0
        %818 = vmatpush1.msra.mxu0 0.0
        %819 = vmatprep.subr.mxu0 0.0
        %820 = vmatpush1.msra.mxu0 0.0
        %821 = vmatprep.subr.mxu0 0.0
        %822 = vmatpush1.msra.mxu0 0.0
        %823 = vmatprep.subr.mxu0 0.0
        %824 = vmatpush1.msra.mxu0 0.0
        %825 = vmatprep.subr.mxu0 0.0
        %826 = vmatpush1.msra.mxu0 0.0
        %827 = vmatprep.subr.mxu0 0.0
        %828 = vmatpush1.msra.mxu0 0.0
        %829 = vmatprep.subr.mxu0 0.0
        %830 = vmatpush1.msra.mxu0 0.0
        %831 = vmatprep.subr.mxu0 0.0
        %832 = vmatpush1.msra.mxu0 0.0
        %833 = vmatprep.mubr.f32.mxu0 0.0
        %834 = vmatmul.mubr.f32.gmra.mrb[0].mxu0 %v767
        %v835 = vpop.f32.mrb[0].mxu0
        %v836 = vadd.f32 0.0, %v835
        %v837 = vpop.f32.mrb[0].mxu0
        %838 = vdwg.mxu0
        %840 = vrot.lane.b32.xlu0 %v836, 16
        %v841 = vpop.permute.xlu0 %840
        %vm843 = vcmask 195712
        %844 = vst.msk [vmem:[#allocation3] sm:$0xff] %vm843, %v841
        %v845 = vld [vmem:[#allocation2] sm:$0xff]
        %847 = vrot.lane.b32.xlu0 %v845, 104
        %v848 = vpop.permute.xlu0 %847
        %849 = vrot.lane.b32.xlu0 %v845, 72
        %v850 = vpop.permute.xlu0 %849
        %v851 = vsel %vm331, %v848, 0
        %v853 = vsel %vm331, %v850, 0
        %855 = vmatprep.subr.mxu0 0.0
        %856 = vmatpush1.xpose.msra.mxu0 %v853
        %857 = vmatprep.subr.mxu0 0.0
        %858 = vmatpush1.xpose.msra.mxu0 0.0
        %859 = vmatprep.subr.mxu0 0.0
        %860 = vmatpush1.xpose.msra.mxu0 0.0
        %861 = vmatprep.subr.mxu0 0.0
        %862 = vmatpush1.xpose.msra.mxu0 0.0
        %863 = vmatprep.subr.mxu0 0.0
        %864 = vmatpush1.xpose.msra.mxu0 0.0
        %865 = vmatprep.subr.mxu0 0.0
        %866 = vmatpush1.xpose.msra.mxu0 0.0
        %867 = vmatprep.subr.mxu0 0.0
        %868 = vmatpush1.xpose.msra.mxu0 0.0
        %869 = vmatprep.subr.mxu0 0.0
        %870 = vmatpush1.xpose.msra.mxu0 0.0
        %871 = vmatprep.subr.mxu0 0.0
        %872 = vmatpush1.xpose.msra.mxu0 0.0
        %873 = vmatprep.subr.mxu0 0.0
        %874 = vmatpush1.xpose.msra.mxu0 0.0
        %875 = vmatprep.subr.mxu0 0.0
        %876 = vmatpush1.xpose.msra.mxu0 0.0
        %877 = vmatprep.subr.mxu0 0.0
        %878 = vmatpush1.xpose.msra.mxu0 0.0
        %879 = vmatprep.subr.mxu0 0.0
        %880 = vmatpush1.xpose.msra.mxu0 0.0
        %881 = vmatprep.subr.mxu0 0.0
        %882 = vmatpush1.xpose.msra.mxu0 0.0
        %883 = vmatprep.subr.mxu0 0.0
        %884 = vmatpush1.xpose.msra.mxu0 0.0
        %885 = vmatprep.subr.mxu0 0.0
        %886 = vmatpush1.xpose.msra.mxu0 0.0
        %887 = vmatprep.subr.mxu0 0.0
        %888 = vmatpush1.xpose.msra.mxu0 0.0
        %889 = vmatprep.subr.mxu0 0.0
        %890 = vmatpush1.xpose.msra.mxu0 0.0
        %891 = vmatprep.subr.mxu0 0.0
        %892 = vmatpush1.xpose.msra.mxu0 0.0
        %893 = vmatprep.subr.mxu0 0.0
        %894 = vmatpush1.xpose.msra.mxu0 0.0
        %895 = vmatprep.subr.mxu0 0.0
        %896 = vmatpush1.xpose.msra.mxu0 0.0
        %897 = vmatprep.subr.mxu0 0.0
        %898 = vmatpush1.xpose.msra.mxu0 0.0
        %899 = vmatprep.subr.mxu0 0.0
        %900 = vmatpush1.xpose.msra.mxu0 0.0
        %901 = vmatprep.subr.mxu0 0.0
        %902 = vmatpush1.xpose.msra.mxu0 0.0
        %903 = vmatprep.subr.mxu0 0.0
        %904 = vmatpush1.xpose.msra.mxu0 0.0
        %905 = vmatprep.subr.mxu0 0.0
        %906 = vmatpush1.xpose.msra.mxu0 0.0
        %907 = vmatprep.subr.mxu0 0.0
        %908 = vmatpush1.xpose.msra.mxu0 0.0
        %909 = vmatprep.subr.mxu0 0.0
        %910 = vmatpush1.xpose.msra.mxu0 0.0
        %911 = vmatprep.subr.mxu0 0.0
        %912 = vmatpush1.xpose.msra.mxu0 0.0
        %913 = vmatprep.subr.mxu0 0.0
        %914 = vmatpush1.xpose.msra.mxu0 0.0
        %915 = vmatprep.subr.mxu0 0.0
        %916 = vmatpush1.xpose.msra.mxu0 0.0
        %917 = vmatprep.subr.mxu0 0.0
        %918 = vmatpush1.xpose.msra.mxu0 0.0
        %919 = vmatprep.mubr.f32.mxu0 0.0
        %920 = vmatmul.mubr.f32.gmra.mrb[0].mxu0 %v851
        %v921 = vpop.f32.mrb[0].mxu0
        %v922 = vadd.f32 0.0, %v921
        %v923 = vpop.f32.mrb[0].mxu0
        %924 = vdwg.mxu0
        %v925 = vsel %vm331, %v922, -inf
        %926 = vmax.xlane.f32.xlu0 %v925
        %v927 = vpop.xlane.xlu0 %926
        %v928 = vsub.f32 %v922, %v927
        %v929 = vmul.f32 %v928, 1.442695
        %v930 = vpow.pop %v929
        %v931 = vsel %vm331, %v930, 0.0
        %932 = vadd.xlane.f32.xlu0 %v931
        %v933 = vpop.xlane.xlu0 %932
        %v934 = vrcp.pop %v933
        %v935 = vmul.f32 %v930, %v934
        %s936 = scalar_lea.vmem %s238, 24 [#allocation10]
        %937 = vst.msk [vmem:[%s936] sm:$0xff] %vm331, %v935
        %938 = vrot.lane.b32.xlu0 %v845, 40
        %v939 = vpop.permute.xlu0 %938
        %v942 = vsel %vm331, %v935, 0
        %944 = vmatprep.subr.mxu0 0.0
        %945 = vmatpush1.msra.mxu0 %v939
        %946 = vmatprep.subr.mxu0 0.0
        %947 = vmatpush1.msra.mxu0 0.0
        %948 = vmatprep.subr.mxu0 0.0
        %949 = vmatpush1.msra.mxu0 0.0
        %950 = vmatprep.subr.mxu0 0.0
        %951 = vmatpush1.msra.mxu0 0.0
        %952 = vmatprep.subr.mxu0 0.0
        %953 = vmatpush1.msra.mxu0 0.0
        %954 = vmatprep.subr.mxu0 0.0
        %955 = vmatpush1.msra.mxu0 0.0
        %956 = vmatprep.subr.mxu0 0.0
        %957 = vmatpush1.msra.mxu0 0.0
        %958 = vmatprep.subr.mxu0 0.0
        %959 = vmatpush1.msra.mxu0 0.0
        %960 = vmatprep.subr.mxu0 0.0
        %961 = vmatpush1.msra.mxu0 0.0
        %962 = vmatprep.subr.mxu0 0.0
        %963 = vmatpush1.msra.mxu0 0.0
        %964 = vmatprep.subr.mxu0 0.0
        %965 = vmatpush1.msra.mxu0 0.0
        %966 = vmatprep.subr.mxu0 0.0
        %967 = vmatpush1.msra.mxu0 0.0
        %968 = vmatprep.subr.mxu0 0.0
        %969 = vmatpush1.msra.mxu0 0.0
        %970 = vmatprep.subr.mxu0 0.0
        %971 = vmatpush1.msra.mxu0 0.0
        %972 = vmatprep.subr.mxu0 0.0
        %973 = vmatpush1.msra.mxu0 0.0
        %974 = vmatprep.subr.mxu0 0.0
        %975 = vmatpush1.msra.mxu0 0.0
        %976 = vmatprep.subr.mxu0 0.0
        %977 = vmatpush1.msra.mxu0 0.0
        %978 = vmatprep.subr.mxu0 0.0
        %979 = vmatpush1.msra.mxu0 0.0
        %980 = vmatprep.subr.mxu0 0.0
        %981 = vmatpush1.msra.mxu0 0.0
        %982 = vmatprep.subr.mxu0 0.0
        %983 = vmatpush1.msra.mxu0 0.0
        %984 = vmatprep.subr.mxu0 0.0
        %985 = vmatpush1.msra.mxu0 0.0
        %986 = vmatprep.subr.mxu0 0.0
        %987 = vmatpush1.msra.mxu0 0.0
        %988 = vmatprep.subr.mxu0 0.0
        %989 = vmatpush1.msra.mxu0 0.0
        %990 = vmatprep.subr.mxu0 0.0
        %991 = vmatpush1.msra.mxu0 0.0
        %992 = vmatprep.subr.mxu0 0.0
        %993 = vmatpush1.msra.mxu0 0.0
        %994 = vmatprep.subr.mxu0 0.0
        %995 = vmatpush1.msra.mxu0 0.0
        %996 = vmatprep.subr.mxu0 0.0
        %997 = vmatpush1.msra.mxu0 0.0
        %998 = vmatprep.subr.mxu0 0.0
        %999 = vmatpush1.msra.mxu0 0.0
        %1000 = vmatprep.subr.mxu0 0.0
        %1001 = vmatpush1.msra.mxu0 0.0
        %1002 = vmatprep.subr.mxu0 0.0
        %1003 = vmatpush1.msra.mxu0 0.0
        %1004 = vmatprep.subr.mxu0 0.0
        %1005 = vmatpush1.msra.mxu0 0.0
        %1006 = vmatprep.subr.mxu0 0.0
        %1007 = vmatpush1.msra.mxu0 0.0
        %1008 = vmatprep.mubr.f32.mxu0 0.0
        %1009 = vmatmul.mubr.f32.gmra.mrb[0].mxu0 %v942
        %v1010 = vpop.f32.mrb[0].mxu0
        %v1011 = vadd.f32 0.0, %v1010
        %v1012 = vpop.f32.mrb[0].mxu0
        %1013 = vdwg.mxu0
        %1015 = vrot.lane.b32.xlu0 %v1011, 24
        %v1016 = vpop.permute.xlu0 %1015
        %vm1018 = vcmask 261312
        %1019 = vst.msk [vmem:[#allocation3] sm:$0xff] %vm1018, %v1016
        %v1020 = vld [vmem:[#allocation3] sm:$0xff]
        %1021 = vst.msk [vmem:[%s231] sm:$0xff] %vm251, %v1020
        %s1022 = sand.u32 %s102, 1
        %s1023 = scalar_lea.sflag [#allocation6], %s1022
        %s1024 = sand.u32 %s102, 1
        %s1025 = smul.addr %s1024, 8
        %s1026 = scalar_lea.vmem [#allocation9], %s1025
        %s1027 = sand.u32 %s128, 1
        %s1028 = scalar_lea.sflag [#allocation11], %s1027
        %s1029 = sand.u32 %s128, 1
        %s1030 = smul.addr %s1029, 32
        %s1031 = scalar_lea.vmem [#allocation10], %s1030
        // Predicated region
        $region41: #{tpu_custom_call.1} parent=31 // pred_check
          %p1032 = pneg %p112
        $region42: #{tpu_custom_call.1} parent=31 // pred_check_branch
          %1034 = sbr.rel (%p1032) target = $region44
        $region43: #{tpu_custom_call.1} parent=31 // pred_region
          %s1036 = ssub.s32 128, 128
          %1037 = vsyncadd %s1023, %s1036
          %s1038 = smul.addr %s26, 128
          %s1039 = scalar_lea.hbm %s3, %s1038
          %s1041 = sshll.u32 %s1026, 4
          %s1042 = int_to_ptr.vmem [resolvable:$true] %s1041
          %1044 = dma.vmem_to_hbm [thread:$0]  %s1042, 128, %s1039, %s1023
        $region44: #{tpu_custom_call.1} parent=31 // pred_fallthru
          _
        // Predicated region
        $region45: #{tpu_custom_call.1} parent=31 // pred_check
          %p1045 = pneg %p138
        $region46: #{tpu_custom_call.1} parent=31 // pred_check_branch
          %1047 = sbr.rel (%p1045) target = $region48
        $region47: #{tpu_custom_call.1} parent=31 // pred_region
          %s1049 = ssub.s32 512, 512
          %1050 = vsyncadd %s1028, %s1049
          %s1051 = smul.addr %s26, 4
          %s1052 = smul.addr %s1051, 128
          %s1053 = scalar_lea.hbm %s4, %s1052
          %s1054 = sshll.u32 %s1031, 4
          %s1055 = int_to_ptr.vmem [resolvable:$true] %s1054
          %1060 = dma.vmem_to_hbm [thread:$0]  %s1055, 512, %s1053, %s1028, 128, 128, 8
        $region48: #{tpu_custom_call.1} parent=31 // pred_fallthru
          _
      $region32: #{tpu_custom_call.1} parent=5 // pred_fallthru
        _
      %p1061 = scmp.le.s32.totalorder 2, %s21
      // Predicated region
      $region49: #{tpu_custom_call.1} parent=5 // pred_check
        %p1062 = pneg %p1061
      $region50: #{tpu_custom_call.1} parent=5 // pred_check_branch
        %1064 = sbr.rel (%p1062) target = $region52
      $region51: #{tpu_custom_call.1} parent=5 // pred_region
        %s1065 = ssub.s32 %s21, 2
        // Predicated region
        $region53: #{tpu_custom_call.1} parent=51 // pred_check
          %p1066 = pneg %p118
        $region54: #{tpu_custom_call.1} parent=51 // pred_check_branch
          %1068 = sbr.rel (%p1066) target = $region56
        $region55: #{tpu_custom_call.1} parent=51 // pred_region
          %s1069 = sand.u32 %s103, 1
          %s1070 = scalar_lea.sflag [#allocation6], %s1069
          %s1071 = sand.u32 %s103, 1
          %s1072 = smul.addr %s1071, 8
          %s1073 = scalar_lea.vmem [#allocation9], %s1072
          %1074 = dma.done %s1070, 128
        $region56: #{tpu_custom_call.1} parent=51 // pred_fallthru
          _
        // Predicated region
        $region57: #{tpu_custom_call.1} parent=51 // pred_check
          %p1075 = pneg %p144
        $region58: #{tpu_custom_call.1} parent=51 // pred_check_branch
          %1077 = sbr.rel (%p1075) target = $region60
        $region59: #{tpu_custom_call.1} parent=51 // pred_region
          %s1078 = sand.u32 %s129, 1
          %s1079 = scalar_lea.sflag [#allocation11], %s1078
          %s1080 = sand.u32 %s129, 1
          %s1081 = smul.addr %s1080, 32
          %s1082 = scalar_lea.vmem [#allocation10], %s1081
          %1083 = dma.done %s1079, 512
        $region60: #{tpu_custom_call.1} parent=51 // pred_fallthru
          _
      $region52: #{tpu_custom_call.1} parent=5 // pred_fallthru
        _
    $region6: #{tpu_custom_call.1} parent=1 // loop_footer
      %s25 = sadd.s32 1, %s21
    $region7: #{tpu_custom_call.1} parent=1 // loop_footer_branch
      %20 = sbr.rel target = $region3
    $region8: #{tpu_custom_call.1} parent=1 // loop_exit
      _
    %1084 = vsyncpa [#allocation5], 1
    %s1085 = scalar_lea.sflag [#allocation5], 1
    %1086 = vsyncpa %s1085, 1
    %1087 = vsyncpa [#allocation8], 1
    %1088 = vsyncpa [#allocation6], 1
    %s1089 = scalar_lea.sflag [#allocation6], 1
    %1090 = vsyncpa %s1089, 1
    %1091 = vsyncpa [#allocation11], 1
    %s1092 = scalar_lea.sflag [#allocation11], 1
    %1093 = vsyncpa %s1092, 1

// kernel: tpu_custom_call.1
$region0: #{tpu_custom_call.1}
  #allocation0 [shape = 'u32[]', space=smem, size = 0x4, offset = 0x4, fixed_abs, tag = 'smem constant byte address 0x4 - core index']
  #allocation1 [shape = 'u32[144,128]{1,0:T(1,128)}', space=vmem, size = 0x12000, scoped, tag = 'internal scratch']
  #allocation2 [shape = 'f32[8,96]{1,0:T(8,128)}', space=vmem, size = 0x1000, scoped, tag = 'scratch operand']
  #allocation3 [shape = 'f32[8,32]{1,0:T(8,128)}', space=vmem, size = 0x1000, scoped, tag = 'scratch operand']
  %s0 = inlined_call_operand.hbm [shape: f32[2,8,32], index: 0, kind: input, shape index: {}]
  %s1 = inlined_call_operand.hbm [shape: f32[32,96], index: 1, kind: input, shape index: {}]
  %s2 = inlined_call_operand.vmem [shape: f32[1,96], index: 2, kind: input, shape index: {}]
  %s3 = inlined_call_operand.hbm [shape: f32[2,8,32], index: 3, kind: output, shape index: {0}]
  %s4 = inlined_call_operand.hbm [shape: f32[2,4,8,8], index: 4, kind: output, shape index: {1}]
  %5 = xla_tuple %s3, %s4
  %s6 = sld [smem:[#allocation0]]
  $region61: #{tpu_custom_call.1} parent=0
    _
  %s8 = ssub.s32 1, %s6
  %s9 = scalar_select 0, %s8, %s6
  $region1: #{tpu_custom_call.1} parent=0
    #allocation4 [shape = 'u8[8192]{0}', space=vmem, size = 0x2000, scoped, tag = 'input window, operand 0']
    #allocation5 [shape = 's32[2]{0}', space=sflag, size = 0x8, scoped, tag = 'scoped memory for tpu_custom_call.1']
    #allocation6 [shape = 's32[2]{0}', space=sflag, size = 0x8, scoped, tag = 'scoped memory for tpu_custom_call.1']
    #allocation7 [shape = 'u8[16384]{0}', space=vmem, size = 0x4000, scoped, tag = 'input window, operand 1, single buffered']
    #allocation8 [shape = 's32[1]{0}', space=sflag, size = 0x4, scoped, tag = 'scoped memory for tpu_custom_call.1']
    #allocation9 [shape = 'u8[8192]{0}', space=vmem, size = 0x2000, scoped, tag = 'output window, operand 0']
    #allocation10 [shape = 'u8[32768]{0}', space=vmem, size = 0x8000, scoped, tag = 'output window, operand 1']
    #allocation11 [shape = 's32[2]{0}', space=sflag, size = 0x8, scoped, tag = 'scoped memory for tpu_custom_call.1']
    %10 = vsyncpa [#allocation5], 0
    %s11 = scalar_lea.sflag [#allocation5], 1
    %12 = vsyncpa %s11, 0
    %13 = vsyncpa [#allocation8], 0
    %14 = vsyncpa [#allocation6], 0
    %s15 = scalar_lea.sflag [#allocation6], 1
    %16 = vsyncpa %s15, 0
    %17 = vsyncpa [#allocation11], 0
    %s18 = scalar_lea.sflag [#allocation11], 1
    %19 = vsyncpa %s18, 0
    loop: start=0, step=1, limit=4
    $region2: #{tpu_custom_call.1} parent=1 // loop_pre_header
      _
    $region3: #{tpu_custom_call.1} parent=1 // loop_header
      %s21 = sphi 0, %s25
      %p22 = scmp.ge.s32.totalorder %s21, 4
      %s31 = sphi 0, %s33
      %s34 = sphi 0, %s31
      %s35 = sphi 0, %s34
      %s51 = sphi 0, %s35
      %s55 = sphi 0, %s55
      %s57 = sphi 0, %s55
      %s58 = sphi 0, %s57
      %s72 = sphi 0, %s58
      %s76 = sphi 0, %s76
      %s78 = sphi 0, %s76
      %s79 = sphi 0, %s78
      %s93 = sphi 0, %s79
      %s99 = sphi 0, %s101
      %s102 = sphi 0, %s99
      %s103 = sphi 0, %s102
      %s119 = sphi 0, %s103
      %s125 = sphi 0, %s127
      %s128 = sphi 0, %s125
      %s129 = sphi 0, %s128
      %s145 = sphi 0, %s129
    $region4: #{tpu_custom_call.1} parent=1 // loop_header_branch
      %24 = sbr.rel (%p22) target = $region8
    $region5: #{tpu_custom_call.1} parent=1 // loop_body
      %s26 = ssub.s32 %s21, 1
      %s27 = ssub.s32 %s21, 2
      %s28 = sadd.s32 %s21, 1
      %s29 = ssub.s32 %s21, %s28
      %p30 = scmp.eq.s32.totalorder %s29, 0
      %s32 = sadd.s32 %s31, 1
      %s33 = scalar_select %p30, %s31, %s32
      %p36 = pneg %p30
      %p37 = scmp.eq.s32.totalorder %s21, 1
      %p38 = por %p36, %p37
      %p39 = scmp.ne.s32.totalorder %s31, %s34
      %p40 = scmp.eq.s32.totalorder %s21, 0
      %p41 = por %p39, %p40
      %p42 = scmp.ne.s32.totalorder %s31, %s34
      %p43 = scmp.eq.s32.totalorder %s26, 1
      %p44 = por %p42, %p43
      %p45 = scmp.ne.s32.totalorder %s34, %s35
      %p46 = scmp.eq.s32.totalorder %s26, 0
      %p47 = por %p45, %p46
      %p48 = scmp.ne.s32.totalorder %s34, %s35
      %p49 = scmp.eq.s32.totalorder %s27, 1
      %p50 = por %p48, %p49
      %p52 = scmp.ne.s32.totalorder %s35, %s51
      %p53 = scmp.eq.s32.totalorder %s27, 0
      %p54 = por %p52, %p53
      %s56 = sadd.s32 %s55, 1
      %p59 = scmp.eq.s32.totalorder %s21, 1
      %p60 = scmp.ne.s32.totalorder %s55, %s57
      %p61 = scmp.eq.s32.totalorder %s21, 0
      %p62 = por %p60, %p61
      %p63 = scmp.ne.s32.totalorder %s55, %s57
      %p64 = scmp.eq.s32.totalorder %s26, 1
      %p65 = por %p63, %p64
      %p66 = scmp.ne.s32.totalorder %s57, %s58
      %p67 = scmp.eq.s32.totalorder %s26, 0
      %p68 = por %p66, %p67
      %p69 = scmp.ne.s32.totalorder %s57, %s58
      %p70 = scmp.eq.s32.totalorder %s27, 1
      %p71 = por %p69, %p70
      %p73 = scmp.ne.s32.totalorder %s58, %s72
      %p74 = scmp.eq.s32.totalorder %s27, 0
      %p75 = por %p73, %p74
      %s77 = sadd.s32 %s76, 1
      %p80 = scmp.eq.s32.totalorder %s21, 1
      %p81 = scmp.ne.s32.totalorder %s76, %s78
      %p82 = scmp.eq.s32.totalorder %s21, 0
      %p83 = por %p81, %p82
      %p84 = scmp.ne.s32.totalorder %s76, %s78
      %p85 = scmp.eq.s32.totalorder %s26, 1
      %p86 = por %p84, %p85
      %p87 = scmp.ne.s32.totalorder %s78, %s79
      %p88 = scmp.eq.s32.totalorder %s26, 0
      %p89 = por %p87, %p88
      %p90 = scmp.ne.s32.totalorder %s78, %s79
      %p91 = scmp.eq.s32.totalorder %s27, 1
      %p92 = por %p90, %p91
      %p94 = scmp.ne.s32.totalorder %s79, %s93
      %p95 = scmp.eq.s32.totalorder %s27, 0
      %p96 = por %p94, %p95
      %s97 = ssub.s32 %s21, %s28
      %p98 = scmp.eq.s32.totalorder %s97, 0
      %s100 = sadd.s32 %s99, 1
      %s101 = scalar_select %p98, %s99, %s100
      %p104 = pneg %p98
      %p105 = scmp.eq.s32.totalorder %s21, 1
      %p106 = por %p104, %p105
      %p107 = scmp.ne.s32.totalorder %s99, %s102
      %p108 = scmp.eq.s32.totalorder %s21, 0
      %p109 = por %p107, %p108
      %p110 = scmp.ne.s32.totalorder %s99, %s102
      %p111 = scmp.eq.s32.totalorder %s26, 1
      %p112 = por %p110, %p111
      %p113 = scmp.ne.s32.totalorder %s102, %s103
      %p114 = scmp.eq.s32.totalorder %s26, 0
      %p115 = por %p113, %p114
      %p116 = scmp.ne.s32.totalorder %s102, %s103
      %p117 = scmp.eq.s32.totalorder %s27, 1
      %p118 = por %p116, %p117
      %p120 = scmp.ne.s32.totalorder %s103, %s119
      %p121 = scmp.eq.s32.totalorder %s27, 0
      %p122 = por %p120, %p121
      %s123 = ssub.s32 %s21, %s28
      %p124 = scmp.eq.s32.totalorder %s123, 0
      %s126 = sadd.s32 %s125, 1
      %s127 = scalar_select %p124, %s125, %s126
      %p130 = pneg %p124
      %p131 = scmp.eq.s32.totalorder %s21, 1
      %p132 = por %p130, %p131
      %p133 = scmp.ne.s32.totalorder %s125, %s128
      %p134 = scmp.eq.s32.totalorder %s21, 0
      %p135 = por %p133, %p134
      %p136 = scmp.ne.s32.totalorder %s125, %s128
      %p137 = scmp.eq.s32.totalorder %s26, 1
      %p138 = por %p136, %p137
      %p139 = scmp.ne.s32.totalorder %s128, %s129
      %p140 = scmp.eq.s32.totalorder %s26, 0
      %p141 = por %p139, %p140
      %p142 = scmp.ne.s32.totalorder %s128, %s129
      %p143 = scmp.eq.s32.totalorder %s27, 1
      %p144 = por %p142, %p143
      %p146 = scmp.ne.s32.totalorder %s129, %s145
      %p147 = scmp.eq.s32.totalorder %s27, 0
      %p148 = por %p146, %p147
      %p149 = scmp.le.s32.totalorder 1, %s21
      %p150 = scmp.lt.s32.totalorder %s21, 3
      %p151 = pnand %p149, %p150
      %p152 = pneg %p151
      // Predicated region
      $region9: #{tpu_custom_call.1} parent=5 // pred_check
        _
      $region10: #{tpu_custom_call.1} parent=5 // pred_check_branch
        %154 = sbr.rel (%p151) target = $region12
      $region11: #{tpu_custom_call.1} parent=5 // pred_region
        %s155 = ssub.s32 %s21, 1
        // Predicated region
        $region13: #{tpu_custom_call.1} parent=11 // pred_check
          %p156 = pneg %p68
        $region14: #{tpu_custom_call.1} parent=11 // pred_check_branch
          %158 = sbr.rel (%p156) target = $region16
        $region15: #{tpu_custom_call.1} parent=11 // pred_region
          %s160 = ssub.s32 512, 512
          %161 = vsyncadd [#allocation8], %s160
          %s162 = sshll.u32 [#allocation7], 4
          %s163 = int_to_ptr.vmem [resolvable:$true] %s162
          %168 = dma.hbm_to_vmem [thread:$0]  %s1, 512, %s163, [#allocation8], 128, 128, 8
        $region16: #{tpu_custom_call.1} parent=11 // pred_fallthru
          _
        // Predicated region
        $region17: #{tpu_custom_call.1} parent=11 // pred_check
          %p169 = pneg %p89
        $region18: #{tpu_custom_call.1} parent=11 // pred_check_branch
          %171 = sbr.rel (%p169) target = $region20
        $region19: #{tpu_custom_call.1} parent=11 // pred_region
          _
        $region20: #{tpu_custom_call.1} parent=11 // pred_fallthru
          _
      $region12: #{tpu_custom_call.1} parent=5 // pred_fallthru
        _
      %p172 = scmp.lt.s32.totalorder %s21, 2
      // Predicated region
      $region21: #{tpu_custom_call.1} parent=5 // pred_check
        %p173 = pneg %p172
      $region22: #{tpu_custom_call.1} parent=5 // pred_check_branch
        %175 = sbr.rel (%p173) target = $region24
      $region23: #{tpu_custom_call.1} parent=5 // pred_region
        // Predicated region
        $region25: #{tpu_custom_call.1} parent=23 // pred_check
          %p176 = pneg %p41
        $region26: #{tpu_custom_call.1} parent=23 // pred_check_branch
          %178 = sbr.rel (%p176) target = $region28
        $region27: #{tpu_custom_call.1} parent=23 // pred_region
          %s179 = sand.u32 %s31, 1
          %s180 = scalar_lea.sflag [#allocation5], %s179
          %s181 = sand.u32 %s31, 1
          %s182 = smul.addr %s181, 8
          %s183 = scalar_lea.vmem [#allocation4], %s182
          %s185 = ssub.s32 128, 128
          %186 = vsyncadd %s180, %s185
          %s187 = smul.addr %s21, 128
          %s188 = scalar_lea.hbm %s0, %s187
          %s190 = sshll.u32 %s183, 4
          %s191 = int_to_ptr.vmem [resolvable:$true] %s190
          %193 = dma.hbm_to_vmem [thread:$0]  %s188, 128, %s191, %s180
        $region28: #{tpu_custom_call.1} parent=23 // pred_fallthru
          _
      $region24: #{tpu_custom_call.1} parent=5 // pred_fallthru
        _
      %p194 = scmp.le.s32.totalorder 1, %s21
      %p195 = scmp.lt.s32.totalorder %s21, 3
      %p196 = pnand %p194, %p195
      %p197 = pneg %p196
      // Predicated region
      $region29: #{tpu_custom_call.1} parent=5 // pred_check
        _
      $region30: #{tpu_custom_call.1} parent=5 // pred_check_branch
        %199 = sbr.rel (%p196) target = $region32
      $region31: #{tpu_custom_call.1} parent=5 // pred_region
        %s200 = ssub.s32 %s21, 1
        %s201 = sand.u32 %s34, 1
        %s202 = scalar_lea.sflag [#allocation5], %s201
        %s203 = sand.u32 %s34, 1
        %s204 = smul.addr %s203, 8
        %s205 = scalar_lea.vmem [#allocation4], %s204
        // Predicated region
        $region33: #{tpu_custom_call.1} parent=31 // pred_check
          %p206 = pneg %p47
        $region34: #{tpu_custom_call.1} parent=31 // pred_check_branch
          %208 = sbr.rel (%p206) target = $region36
        $region35: #{tpu_custom_call.1} parent=31 // pred_region
          %209 = dma.done %s202, 128
        $region36: #{tpu_custom_call.1} parent=31 // pred_fallthru
          _
        // Predicated region
        $region37: #{tpu_custom_call.1} parent=31 // pred_check
          %p210 = pneg %p68
        $region38: #{tpu_custom_call.1} parent=31 // pred_check_branch
          %212 = sbr.rel (%p210) target = $region40
        $region39: #{tpu_custom_call.1} parent=31 // pred_region
          %213 = dma.done [#allocation8], 512
        $region40: #{tpu_custom_call.1} parent=31 // pred_fallthru
          _
        %s214 = sand.u32 %s34, 1
        %s215 = scalar_lea.sflag [#allocation5], %s214
        %s216 = sand.u32 %s34, 1
        %s217 = smul.addr %s216, 8
        %s218 = scalar_lea.vmem [#allocation4], %s217
        %p219 = pneg %p47
        %p220 = pneg %p44
        %p221 = pneg %p68
        %p222 = pneg %p65
        %p223 = pneg %p89
        %p224 = pneg %p86
        %p225 = pneg %p115
        %p226 = pneg %p112
        %s227 = sand.u32 %s102, 1
        %s228 = scalar_lea.sflag [#allocation6], %s227
        %s229 = sand.u32 %s102, 1
        %s230 = smul.addr %s229, 8
        %s231 = scalar_lea.vmem [#allocation9], %s230
        %p232 = pneg %p141
        %p233 = pneg %p138
        %s234 = sand.u32 %s128, 1
        %s235 = scalar_lea.sflag [#allocation11], %s234
        %s236 = sand.u32 %s128, 1
        %s237 = smul.addr %s236, 32
        %s238 = scalar_lea.vmem [#allocation10], %s237
        %v239 = vld [vmem:[%s205] sm:$0xff]
        %v240 = vld [vmem:[#allocation7] sm:$0xff]
        %v241 = vld [vmem:[#allocation7 + $0x8] sm:$0xff]
        %v242 = vld [vmem:[#allocation7 + $0x10] sm:$0xff]
        %v243 = vld [vmem:[#allocation7 + $0x18] sm:$0xff]
        %v244 = vld [vmem:[%s2] sm:$0x1]
        %v246 = vlaneseq
        %v247 = vshrl.u32 %v246, 7
        %v248 = vsub.s32 0, %v247
        %v249 = vrot.slane %v244, %v248
        %vm251 = vcmask 261120
        %v253 = vsel %vm251, %v239, 0
        %255 = vmatprep.subr.mxu0 0.0
        %256 = vmatpush1.msra.mxu0 %v240
        %257 = vmatprep.subr.mxu0 0.0
        %258 = vmatpush1.msra.mxu0 %v241
        %259 = vmatprep.subr.mxu0 0.0
        %260 = vmatpush1.msra.mxu0 %v242
        %261 = vmatprep.subr.mxu0 0.0
        %262 = vmatpush1.msra.mxu0 %v243
        %263 = vmatprep.subr.mxu0 0.0
        %264 = vmatpush1.msra.mxu0 0.0
        %265 = vmatprep.subr.mxu0 0.0
        %266 = vmatpush1.msra.mxu0 0.0
        %267 = vmatprep.subr.mxu0 0.0
        %268 = vmatpush1.msra.mxu0 0.0
        %269 = vmatprep.subr.mxu0 0.0
        %270 = vmatpush1.msra.mxu0 0.0
        %271 = vmatprep.subr.mxu0 0.0
        %272 = vmatpush1.msra.mxu0 0.0
        %273 = vmatprep.subr.mxu0 0.0
        %274 = vmatpush1.msra.mxu0 0.0
        %275 = vmatprep.subr.mxu0 0.0
        %276 = vmatpush1.msra.mxu0 0.0
        %277 = vmatprep.subr.mxu0 0.0
        %278 = vmatpush1.msra.mxu0 0.0
        %279 = vmatprep.subr.mxu0 0.0
        %280 = vmatpush1.msra.mxu0 0.0
        %281 = vmatprep.subr.mxu0 0.0
        %282 = vmatpush1.msra.mxu0 0.0
        %283 = vmatprep.subr.mxu0 0.0
        %284 = vmatpush1.msra.mxu0 0.0
        %285 = vmatprep.subr.mxu0 0.0
        %286 = vmatpush1.msra.mxu0 0.0
        %287 = vmatprep.subr.mxu0 0.0
        %288 = vmatpush1.msra.mxu0 0.0
        %289 = vmatprep.subr.mxu0 0.0
        %290 = vmatpush1.msra.mxu0 0.0
        %291 = vmatprep.subr.mxu0 0.0
        %292 = vmatpush1.msra.mxu0 0.0
        %293 = vmatprep.subr.mxu0 0.0
        %294 = vmatpush1.msra.mxu0 0.0
        %295 = vmatprep.subr.mxu0 0.0
        %296 = vmatpush1.msra.mxu0 0.0
        %297 = vmatprep.subr.mxu0 0.0
        %298 = vmatpush1.msra.mxu0 0.0
        %299 = vmatprep.subr.mxu0 0.0
        %300 = vmatpush1.msra.mxu0 0.0
        %301 = vmatprep.subr.mxu0 0.0
        %302 = vmatpush1.msra.mxu0 0.0
        %303 = vmatprep.subr.mxu0 0.0
        %304 = vmatpush1.msra.mxu0 0.0
        %305 = vmatprep.subr.mxu0 0.0
        %306 = vmatpush1.msra.mxu0 0.0
        %307 = vmatprep.subr.mxu0 0.0
        %308 = vmatpush1.msra.mxu0 0.0
        %309 = vmatprep.subr.mxu0 0.0
        %310 = vmatpush1.msra.mxu0 0.0
        %311 = vmatprep.subr.mxu0 0.0
        %312 = vmatpush1.msra.mxu0 0.0
        %313 = vmatprep.subr.mxu0 0.0
        %314 = vmatpush1.msra.mxu0 0.0
        %315 = vmatprep.subr.mxu0 0.0
        %316 = vmatpush1.msra.mxu0 0.0
        %317 = vmatprep.subr.mxu0 0.0
        %318 = vmatpush1.msra.mxu0 0.0
        %319 = vmatprep.mubr.f32.mxu0 0.0
        %320 = vmatmul.mubr.f32.gmra.mrb[0].mxu0 %v253
        %v321 = vpop.f32.mrb[0].mxu0
        %v322 = vadd.f32 %v249, %v321
        %v323 = vpop.f32.mrb[0].mxu0
        %324 = vdwg.mxu0
        %vm325 = vcmask 785408
        %326 = vst.msk [vmem:[#allocation2] sm:$0xff] %vm325, %v322
        %v327 = vld [vmem:[#allocation2] sm:$0xff]
        %329 = vrot.lane.b32.xlu0 %v327, 96
        %v330 = vpop.permute.xlu0 %329
        %vm331 = vcmask 64512
        %v332 = vsel %vm331, %v327, 0
        %v334 = vsel %vm331, %v330, 0
        %336 = vmatprep.subr.mxu0 0.0
        %337 = vmatpush1.xpose.msra.mxu0 %v334
        %338 = vmatprep.subr.mxu0 0.0
        %339 = vmatpush1.xpose.msra.mxu0 0.0
        %340 = vmatprep.subr.mxu0 0.0
        %341 = vmatpush1.xpose.msra.mxu0 0.0
        %342 = vmatprep.subr.mxu0 0.0
        %343 = vmatpush1.xpose.msra.mxu0 0.0
        %344 = vmatprep.subr.mxu0 0.0
        %345 = vmatpush1.xpose.msra.mxu0 0.0
        %346 = vmatprep.subr.mxu0 0.0
        %347 = vmatpush1.xpose.msra.mxu0 0.0
        %348 = vmatprep.subr.mxu0 0.0
        %349 = vmatpush1.xpose.msra.mxu0 0.0
        %350 = vmatprep.subr.mxu0 0.0
        %351 = vmatpush1.xpose.msra.mxu0 0.0
        %352 = vmatprep.subr.mxu0 0.0
        %353 = vmatpush1.xpose.msra.mxu0 0.0
        %354 = vmatprep.subr.mxu0 0.0
        %355 = vmatpush1.xpose.msra.mxu0 0.0
        %356 = vmatprep.subr.mxu0 0.0
        %357 = vmatpush1.xpose.msra.mxu0 0.0
        %358 = vmatprep.subr.mxu0 0.0
        %359 = vmatpush1.xpose.msra.mxu0 0.0
        %360 = vmatprep.subr.mxu0 0.0
        %361 = vmatpush1.xpose.msra.mxu0 0.0
        %362 = vmatprep.subr.mxu0 0.0
        %363 = vmatpush1.xpose.msra.mxu0 0.0
        %364 = vmatprep.subr.mxu0 0.0
        %365 = vmatpush1.xpose.msra.mxu0 0.0
        %366 = vmatprep.subr.mxu0 0.0
        %367 = vmatpush1.xpose.msra.mxu0 0.0
        %368 = vmatprep.subr.mxu0 0.0
        %369 = vmatpush1.xpose.msra.mxu0 0.0
        %370 = vmatprep.subr.mxu0 0.0
        %371 = vmatpush1.xpose.msra.mxu0 0.0
        %372 = vmatprep.subr.mxu0 0.0
        %373 = vmatpush1.xpose.msra.mxu0 0.0
        %374 = vmatprep.subr.mxu0 0.0
        %375 = vmatpush1.xpose.msra.mxu0 0.0
        %376 = vmatprep.subr.mxu0 0.0
        %377 = vmatpush1.xpose.msra.mxu0 0.0
        %378 = vmatprep.subr.mxu0 0.0
        %379 = vmatpush1.xpose.msra.mxu0 0.0
        %380 = vmatprep.subr.mxu0 0.0
        %381 = vmatpush1.xpose.msra.mxu0 0.0
        %382 = vmatprep.subr.mxu0 0.0
        %383 = vmatpush1.xpose.msra.mxu0 0.0
        %384 = vmatprep.subr.mxu0 0.0
        %385 = vmatpush1.xpose.msra.mxu0 0.0
        %386 = vmatprep.subr.mxu0 0.0
        %387 = vmatpush1.xpose.msra.mxu0 0.0
        %388 = vmatprep.subr.mxu0 0.0
        %389 = vmatpush1.xpose.msra.mxu0 0.0
        %390 = vmatprep.subr.mxu0 0.0
        %391 = vmatpush1.xpose.msra.mxu0 0.0
        %392 = vmatprep.subr.mxu0 0.0
        %393 = vmatpush1.xpose.msra.mxu0 0.0
        %394 = vmatprep.subr.mxu0 0.0
        %395 = vmatpush1.xpose.msra.mxu0 0.0
        %396 = vmatprep.subr.mxu0 0.0
        %397 = vmatpush1.xpose.msra.mxu0 0.0
        %398 = vmatprep.subr.mxu0 0.0
        %399 = vmatpush1.xpose.msra.mxu0 0.0
        %400 = vmatprep.mubr.f32.mxu0 0.0
        %401 = vmatmul.mubr.f32.gmra.mrb[0].mxu0 %v332
        %v402 = vpop.f32.mrb[0].mxu0
        %v403 = vadd.f32 0.0, %v402
        %v404 = vpop.f32.mrb[0].mxu0
        %405 = vdwg.mxu0
        %v406 = vsel %vm331, %v403, -inf
        %407 = vmax.xlane.f32.xlu0 %v406
        %v408 = vpop.xlane.xlu0 %407
        %v409 = vsub.f32 %v403, %v408
        %v410 = vmul.f32 %v409, 1.442695
        %v411 = vpow.pop %v410
        %v412 = vsel %vm331, %v411, 0.0
        %413 = vadd.xlane.f32.xlu0 %v412
        %v414 = vpop.xlane.xlu0 %413
        %v415 = vrcp.pop %v414
        %v416 = vmul.f32 %v411, %v415
        %417 = vst.msk [vmem:[%s238] sm:$0xff] %vm331, %v416
        %418 = vrot.lane.b32.xlu0 %v327, 64
        %v419 = vpop.permute.xlu0 %418
        %v422 = vsel %vm331, %v416, 0
        %424 = vmatprep.subr.mxu0 0.0
        %425 = vmatpush1.msra.mxu0 %v419
        %426 = vmatprep.subr.mxu0 0.0
        %427 = vmatpush1.msra.mxu0 0.0
        %428 = vmatprep.subr.mxu0 0.0
        %429 = vmatpush1.msra.mxu0 0.0
        %430 = vmatprep.subr.mxu0 0.0
        %431 = vmatpush1.msra.mxu0 0.0
        %432 = vmatprep.subr.mxu0 0.0
        %433 = vmatpush1.msra.mxu0 0.0
        %434 = vmatprep.subr.mxu0 0.0
        %435 = vmatpush1.msra.mxu0 0.0
        %436 = vmatprep.subr.mxu0 0.0
        %437 = vmatpush1.msra.mxu0 0.0
        %438 = vmatprep.subr.mxu0 0.0
        %439 = vmatpush1.msra.mxu0 0.0
        %440 = vmatprep.subr.mxu0 0.0
        %441 = vmatpush1.msra.mxu0 0.0
        %442 = vmatprep.subr.mxu0 0.0
        %443 = vmatpush1.msra.mxu0 0.0
        %444 = vmatprep.subr.mxu0 0.0
        %445 = vmatpush1.msra.mxu0 0.0
        %446 = vmatprep.subr.mxu0 0.0
        %447 = vmatpush1.msra.mxu0 0.0
        %448 = vmatprep.subr.mxu0 0.0
        %449 = vmatpush1.msra.mxu0 0.0
        %450 = vmatprep.subr.mxu0 0.0
        %451 = vmatpush1.msra.mxu0 0.0
        %452 = vmatprep.subr.mxu0 0.0
        %453 = vmatpush1.msra.mxu0 0.0
        %454 = vmatprep.subr.mxu0 0.0
        %455 = vmatpush1.msra.mxu0 0.0
        %456 = vmatprep.subr.mxu0 0.0
        %457 = vmatpush1.msra.mxu0 0.0
        %458 = vmatprep.subr.mxu0 0.0
        %459 = vmatpush1.msra.mxu0 0.0
        %460 = vmatprep.subr.mxu0 0.0
        %461 = vmatpush1.msra.mxu0 0.0
        %462 = vmatprep.subr.mxu0 0.0
        %463 = vmatpush1.msra.mxu0 0.0
        %464 = vmatprep.subr.mxu0 0.0
        %465 = vmatpush1.msra.mxu0 0.0
        %466 = vmatprep.subr.mxu0 0.0
        %467 = vmatpush1.msra.mxu0 0.0
        %468 = vmatprep.subr.mxu0 0.0
        %469 = vmatpush1.msra.mxu0 0.0
        %470 = vmatprep.subr.mxu0 0.0
        %471 = vmatpush1.msra.mxu0 0.0
        %472 = vmatprep.subr.mxu0 0.0
        %473 = vmatpush1.msra.mxu0 0.0
        %474 = vmatprep.subr.mxu0 0.0
        %475 = vmatpush1.msra.mxu0 0.0
        %476 = vmatprep.subr.mxu0 0.0
        %477 = vmatpush1.msra.mxu0 0.0
        %478 = vmatprep.subr.mxu0 0.0
        %479 = vmatpush1.msra.mxu0 0.0
        %480 = vmatprep.subr.mxu0 0.0
        %481 = vmatpush1.msra.mxu0 0.0
        %482 = vmatprep.subr.mxu0 0.0
        %483 = vmatpush1.msra.mxu0 0.0
        %484 = vmatprep.subr.mxu0 0.0
        %485 = vmatpush1.msra.mxu0 0.0
        %486 = vmatprep.subr.mxu0 0.0
        %487 = vmatpush1.msra.mxu0 0.0
        %488 = vmatprep.mubr.f32.mxu0 0.0
        %489 = vmatmul.mubr.f32.gmra.mrb[0].mxu0 %v422
        %v490 = vpop.f32.mrb[0].mxu0
        %v491 = vadd.f32 0.0, %v490
        %v492 = vpop.f32.mrb[0].mxu0
        %493 = vdwg.mxu0
        %494 = vst.msk [vmem:[#allocation3] sm:$0xff] %vm331, %v491
        %v495 = vld [vmem:[#allocation2] sm:$0xff]
        %497 = vrot.lane.b32.xlu0 %v495, 120
        %v498 = vpop.permute.xlu0 %497
        %499 = vrot.lane.b32.xlu0 %v495, 88
        %v500 = vpop.permute.xlu0 %499
        %v501 = vsel %vm331, %v498, 0
        %v503 = vsel %vm331, %v500, 0
        %505 = vmatprep.subr.mxu0 0.0
        %506 = vmatpush1.xpose.msra.mxu0 %v503
        %507 = vmatprep.subr.mxu0 0.0
        %508 = vmatpush1.xpose.msra.mxu0 0.0
        %509 = vmatprep.subr.mxu0 0.0
        %510 = vmatpush1.xpose.msra.mxu0 0.0
        %511 = vmatprep.subr.mxu0 0.0
        %512 = vmatpush1.xpose.msra.mxu0 0.0
        %513 = vmatprep.subr.mxu0 0.0
        %514 = vmatpush1.xpose.msra.mxu0 0.0
        %515 = vmatprep.subr.mxu0 0.0
        %516 = vmatpush1.xpose.msra.mxu0 0.0
        %517 = vmatprep.subr.mxu0 0.0
        %518 = vmatpush1.xpose.msra.mxu0 0.0
        %519 = vmatprep.subr.mxu0 0.0
        %520 = vmatpush1.xpose.msra.mxu0 0.0
        %521 = vmatprep.subr.mxu0 0.0
        %522 = vmatpush1.xpose.msra.mxu0 0.0
        %523 = vmatprep.subr.mxu0 0.0
        %524 = vmatpush1.xpose.msra.mxu0 0.0
        %525 = vmatprep.subr.mxu0 0.0
        %526 = vmatpush1.xpose.msra.mxu0 0.0
        %527 = vmatprep.subr.mxu0 0.0
        %528 = vmatpush1.xpose.msra.mxu0 0.0
        %529 = vmatprep.subr.mxu0 0.0
        %530 = vmatpush1.xpose.msra.mxu0 0.0
        %531 = vmatprep.subr.mxu0 0.0
        %532 = vmatpush1.xpose.msra.mxu0 0.0
        %533 = vmatprep.subr.mxu0 0.0
        %534 = vmatpush1.xpose.msra.mxu0 0.0
        %535 = vmatprep.subr.mxu0 0.0
        %536 = vmatpush1.xpose.msra.mxu0 0.0
        %537 = vmatprep.subr.mxu0 0.0
        %538 = vmatpush1.xpose.msra.mxu0 0.0
        %539 = vmatprep.subr.mxu0 0.0
        %540 = vmatpush1.xpose.msra.mxu0 0.0
        %541 = vmatprep.subr.mxu0 0.0
        %542 = vmatpush1.xpose.msra.mxu0 0.0
        %543 = vmatprep.subr.mxu0 0.0
        %544 = vmatpush1.xpose.msra.mxu0 0.0
        %545 = vmatprep.subr.mxu0 0.0
        %546 = vmatpush1.xpose.msra.mxu0 0.0
        %547 = vmatprep.subr.mxu0 0.0
        %548 = vmatpush1.xpose.msra.mxu0 0.0
        %549 = vmatprep.subr.mxu0 0.0
        %550 = vmatpush1.xpose.msra.mxu0 0.0
        %551 = vmatprep.subr.mxu0 0.0
        %552 = vmatpush1.xpose.msra.mxu0 0.0
        %553 = vmatprep.subr.mxu0 0.0
        %554 = vmatpush1.xpose.msra.mxu0 0.0
        %555 = vmatprep.subr.mxu0 0.0
        %556 = vmatpush1.xpose.msra.mxu0 0.0
        %557 = vmatprep.subr.mxu0 0.0
        %558 = vmatpush1.xpose.msra.mxu0 0.0
        %559 = vmatprep.subr.mxu0 0.0
        %560 = vmatpush1.xpose.msra.mxu0 0.0
        %561 = vmatprep.subr.mxu0 0.0
        %562 = vmatpush1.xpose.msra.mxu0 0.0
        %563 = vmatprep.subr.mxu0 0.0
        %564 = vmatpush1.xpose.msra.mxu0 0.0
        %565 = vmatprep.subr.mxu0 0.0
        %566 = vmatpush1.xpose.msra.mxu0 0.0
        %567 = vmatprep.subr.mxu0 0.0
        %568 = vmatpush1.xpose.msra.mxu0 0.0
        %569 = vmatprep.mubr.f32.mxu0 0.0
        %570 = vmatmul.mubr.f32.gmra.mrb[0].mxu0 %v501
        %v571 = vpop.f32.mrb[0].mxu0
        %v572 = vadd.f32 0.0, %v571
        %v573 = vpop.f32.mrb[0].mxu0
        %574 = vdwg.mxu0
        %v575 = vsel %vm331, %v572, -inf
        %576 = vmax.xlane.f32.xlu0 %v575
        %v577 = vpop.xlane.xlu0 %576
        %v578 = vsub.f32 %v572, %v577
        %v579 = vmul.f32 %v578, 1.442695
        %v580 = vpow.pop %v579
        %v581 = vsel %vm331, %v580, 0.0
        %582 = vadd.xlane.f32.xlu0 %v581
        %v583 = vpop.xlane.xlu0 %582
        %v584 = vrcp.pop %v583
        %v585 = vmul.f32 %v580, %v584
        %s586 = scalar_lea.vmem %s238, 8 [#allocation10]
        %587 = vst.msk [vmem:[%s586] sm:$0xff] %vm331, %v585
        %588 = vrot.lane.b32.xlu0 %v495, 56
        %v589 = vpop.permute.xlu0 %588
        %v592 = vsel %vm331, %v585, 0
        %594 = vmatprep.subr.mxu0 0.0
        %595 = vmatpush1.msra.mxu0 %v589
        %596 = vmatprep.subr.mxu0 0.0
        %597 = vmatpush1.msra.mxu0 0.0
        %598 = vmatprep.subr.mxu0 0.0
        %599 = vmatpush1.msra.mxu0 0.0
        %600 = vmatprep.subr.mxu0 0.0
        %601 = vmatpush1.msra.mxu0 0.0
        %602 = vmatprep.subr.mxu0 0.0
        %603 = vmatpush1.msra.mxu0 0.0
        %604 = vmatprep.subr.mxu0 0.0
        %605 = vmatpush1.msra.mxu0 0.0
        %606 = vmatprep.subr.mxu0 0.0
        %607 = vmatpush1.msra.mxu0 0.0
        %608 = vmatprep.subr.mxu0 0.0
        %609 = vmatpush1.msra.mxu0 0.0
        %610 = vmatprep.subr.mxu0 0.0
        %611 = vmatpush1.msra.mxu0 0.0
        %612 = vmatprep.subr.mxu0 0.0
        %613 = vmatpush1.msra.mxu0 0.0
        %614 = vmatprep.subr.mxu0 0.0
        %615 = vmatpush1.msra.mxu0 0.0
        %616 = vmatprep.subr.mxu0 0.0
        %617 = vmatpush1.msra.mxu0 0.0
        %618 = vmatprep.subr.mxu0 0.0
        %619 = vmatpush1.msra.mxu0 0.0
        %620 = vmatprep.subr.mxu0 0.0
        %621 = vmatpush1.msra.mxu0 0.0
        %622 = vmatprep.subr.mxu0 0.0
        %623 = vmatpush1.msra.mxu0 0.0
        %624 = vmatprep.subr.mxu0 0.0
        %625 = vmatpush1.msra.mxu0 0.0
        %626 = vmatprep.subr.mxu0 0.0
        %627 = vmatpush1.msra.mxu0 0.0
        %628 = vmatprep.subr.mxu0 0.0
        %629 = vmatpush1.msra.mxu0 0.0
        %630 = vmatprep.subr.mxu0 0.0
        %631 = vmatpush1.msra.mxu0 0.0
        %632 = vmatprep.subr.mxu0 0.0
        %633 = vmatpush1.msra.mxu0 0.0
        %634 = vmatprep.subr.mxu0 0.0
        %635 = vmatpush1.msra.mxu0 0.0
        %636 = vmatprep.subr.mxu0 0.0
        %637 = vmatpush1.msra.mxu0 0.0
        %638 = vmatprep.subr.mxu0 0.0
        %639 = vmatpush1.msra.mxu0 0.0
        %640 = vmatprep.subr.mxu0 0.0
        %641 = vmatpush1.msra.mxu0 0.0
        %642 = vmatprep.subr.mxu0 0.0
        %643 = vmatpush1.msra.mxu0 0.0
        %644 = vmatprep.subr.mxu0 0.0
        %645 = vmatpush1.msra.mxu0 0.0
        %646 = vmatprep.subr.mxu0 0.0
        %647 = vmatpush1.msra.mxu0 0.0
        %648 = vmatprep.subr.mxu0 0.0
        %649 = vmatpush1.msra.mxu0 0.0
        %650 = vmatprep.subr.mxu0 0.0
        %651 = vmatpush1.msra.mxu0 0.0
        %652 = vmatprep.subr.mxu0 0.0
        %653 = vmatpush1.msra.mxu0 0.0
        %654 = vmatprep.subr.mxu0 0.0
        %655 = vmatpush1.msra.mxu0 0.0
        %656 = vmatprep.subr.mxu0 0.0
        %657 = vmatpush1.msra.mxu0 0.0
        %658 = vmatprep.mubr.f32.mxu0 0.0
        %659 = vmatmul.mubr.f32.gmra.mrb[0].mxu0 %v592
        %v660 = vpop.f32.mrb[0].mxu0
        %v661 = vadd.f32 0.0, %v660
        %v662 = vpop.f32.mrb[0].mxu0
        %663 = vdwg.mxu0
        %665 = vrot.lane.b32.xlu0 %v661, 8
        %v666 = vpop.permute.xlu0 %665
        %vm668 = vcmask 130112
        %669 = vst.msk [vmem:[#allocation3] sm:$0xff] %vm668, %v666
        %v670 = vld [vmem:[#allocation2] sm:$0xff]
        %672 = vrot.lane.b32.xlu0 %v670, 112
        %v673 = vpop.permute.xlu0 %672
        %674 = vrot.lane.b32.xlu0 %v670, 80
        %v675 = vpop.permute.xlu0 %674
        %v676 = vsel %vm331, %v673, 0
        %v678 = vsel %vm331, %v675, 0
        %680 = vmatprep.subr.mxu0 0.0
        %681 = vmatpush1.xpose.msra.mxu0 %v678
        %682 = vmatprep.subr.mxu0 0.0
        %683 = vmatpush1.xpose.msra.mxu0 0.0
        %684 = vmatprep.subr.mxu0 0.0
        %685 = vmatpush1.xpose.msra.mxu0 0.0
        %686 = vmatprep.subr.mxu0 0.0
        %687 = vmatpush1.xpose.msra.mxu0 0.0
        %688 = vmatprep.subr.mxu0 0.0
        %689 = vmatpush1.xpose.msra.mxu0 0.0
        %690 = vmatprep.subr.mxu0 0.0
        %691 = vmatpush1.xpose.msra.mxu0 0.0
        %692 = vmatprep.subr.mxu0 0.0
        %693 = vmatpush1.xpose.msra.mxu0 0.0
        %694 = vmatprep.subr.mxu0 0.0
        %695 = vmatpush1.xpose.msra.mxu0 0.0
        %696 = vmatprep.subr.mxu0 0.0
        %697 = vmatpush1.xpose.msra.mxu0 0.0
        %698 = vmatprep.subr.mxu0 0.0
        %699 = vmatpush1.xpose.msra.mxu0 0.0
        %700 = vmatprep.subr.mxu0 0.0
        %701 = vmatpush1.xpose.msra.mxu0 0.0
        %702 = vmatprep.subr.mxu0 0.0
        %703 = vmatpush1.xpose.msra.mxu0 0.0
        %704 = vmatprep.subr.mxu0 0.0
        %705 = vmatpush1.xpose.msra.mxu0 0.0
        %706 = vmatprep.subr.mxu0 0.0
        %707 = vmatpush1.xpose.msra.mxu0 0.0
        %708 = vmatprep.subr.mxu0 0.0
        %709 = vmatpush1.xpose.msra.mxu0 0.0
        %710 = vmatprep.subr.mxu0 0.0
        %711 = vmatpush1.xpose.msra.mxu0 0.0
        %712 = vmatprep.subr.mxu0 0.0
        %713 = vmatpush1.xpose.msra.mxu0 0.0
        %714 = vmatprep.subr.mxu0 0.0
        %715 = vmatpush1.xpose.msra.mxu0 0.0
        %716 = vmatprep.subr.mxu0 0.0
        %717 = vmatpush1.xpose.msra.mxu0 0.0
        %718 = vmatprep.subr.mxu0 0.0
        %719 = vmatpush1.xpose.msra.mxu0 0.0
        %720 = vmatprep.subr.mxu0 0.0
        %721 = vmatpush1.xpose.msra.mxu0 0.0
        %722 = vmatprep.subr.mxu0 0.0
        %723 = vmatpush1.xpose.msra.mxu0 0.0
        %724 = vmatprep.subr.mxu0 0.0
        %725 = vmatpush1.xpose.msra.mxu0 0.0
        %726 = vmatprep.subr.mxu0 0.0
        %727 = vmatpush1.xpose.msra.mxu0 0.0
        %728 = vmatprep.subr.mxu0 0.0
        %729 = vmatpush1.xpose.msra.mxu0 0.0
        %730 = vmatprep.subr.mxu0 0.0
        %731 = vmatpush1.xpose.msra.mxu0 0.0
        %732 = vmatprep.subr.mxu0 0.0
        %733 = vmatpush1.xpose.msra.mxu0 0.0
        %734 = vmatprep.subr.mxu0 0.0
        %735 = vmatpush1.xpose.msra.mxu0 0.0
        %736 = vmatprep.subr.mxu0 0.0
        %737 = vmatpush1.xpose.msra.mxu0 0.0
        %738 = vmatprep.subr.mxu0 0.0
        %739 = vmatpush1.xpose.msra.mxu0 0.0
        %740 = vmatprep.subr.mxu0 0.0
        %741 = vmatpush1.xpose.msra.mxu0 0.0
        %742 = vmatprep.subr.mxu0 0.0
        %743 = vmatpush1.xpose.msra.mxu0 0.0
        %744 = vmatprep.mubr.f32.mxu0 0.0
        %745 = vmatmul.mubr.f32.gmra.mrb[0].mxu0 %v676
        %v746 = vpop.f32.mrb[0].mxu0
        %v747 = vadd.f32 0.0, %v746
        %v748 = vpop.f32.mrb[0].mxu0
        %749 = vdwg.mxu0
        %v750 = vsel %vm331, %v747, -inf
        %751 = vmax.xlane.f32.xlu0 %v750
        %v752 = vpop.xlane.xlu0 %751
        %v753 = vsub.f32 %v747, %v752
        %v754 = vmul.f32 %v753, 1.442695
        %v755 = vpow.pop %v754
        %v756 = vsel %vm331, %v755, 0.0
        %757 = vadd.xlane.f32.xlu0 %v756
        %v758 = vpop.xlane.xlu0 %757
        %v759 = vrcp.pop %v758
        %v760 = vmul.f32 %v755, %v759
        %s761 = scalar_lea.vmem %s238, 16 [#allocation10]
        %762 = vst.msk [vmem:[%s761] sm:$0xff] %vm331, %v760
        %763 = vrot.lane.b32.xlu0 %v670, 48
        %v764 = vpop.permute.xlu0 %763
        %v767 = vsel %vm331, %v760, 0
        %769 = vmatprep.subr.mxu0 0.0
        %770 = vmatpush1.msra.mxu0 %v764
        %771 = vmatprep.subr.mxu0 0.0
        %772 = vmatpush1.msra.mxu0 0.0
        %773 = vmatprep.subr.mxu0 0.0
        %774 = vmatpush1.msra.mxu0 0.0
        %775 = vmatprep.subr.mxu0 0.0
        %776 = vmatpush1.msra.mxu0 0.0
        %777 = vmatprep.subr.mxu0 0.0
        %778 = vmatpush1.msra.mxu0 0.0
        %779 = vmatprep.subr.mxu0 0.0
        %780 = vmatpush1.msra.mxu0 0.0
        %781 = vmatprep.subr.mxu0 0.0
        %782 = vmatpush1.msra.mxu0 0.0
        %783 = vmatprep.subr.mxu0 0.0
        %784 = vmatpush1.msra.mxu0 0.0
        %785 = vmatprep.subr.mxu0 0.0
        %786 = vmatpush1.msra.mxu0 0.0
        %787 = vmatprep.subr.mxu0 0.0
        %788 = vmatpush1.msra.mxu0 0.0
        %789 = vmatprep.subr.mxu0 0.0
        %790 = vmatpush1.msra.mxu0 0.0
        %791 = vmatprep.subr.mxu0 0.0
        %792 = vmatpush1.msra.mxu0 0.0
        %793 = vmatprep.subr.mxu0 0.0
        %794 = vmatpush1.msra.mxu0 0.0
        %795 = vmatprep.subr.mxu0 0.0
        %796 = vmatpush1.msra.mxu0 0.0
        %797 = vmatprep.subr.mxu0 0.0
        %798 = vmatpush1.msra.mxu0 0.0
        %799 = vmatprep.subr.mxu0 0.0
        %800 = vmatpush1.msra.mxu0 0.0
        %801 = vmatprep.subr.mxu0 0.0
        %802 = vmatpush1.msra.mxu0 0.0
        %803 = vmatprep.subr.mxu0 0.0
        %804 = vmatpush1.msra.mxu0 0.0
        %805 = vmatprep.subr.mxu0 0.0
        %806 = vmatpush1.msra.mxu0 0.0
        %807 = vmatprep.subr.mxu0 0.0
        %808 = vmatpush1.msra.mxu0 0.0
        %809 = vmatprep.subr.mxu0 0.0
        %810 = vmatpush1.msra.mxu0 0.0
        %811 = vmatprep.subr.mxu0 0.0
        %812 = vmatpush1.msra.mxu0 0.0
        %813 = vmatprep.subr.mxu0 0.0
        %814 = vmatpush1.msra.mxu0 0.0
        %815 = vmatprep.subr.mxu0 0.0
        %816 = vmatpush1.msra.mxu0 0.0
        %817 = vmatprep.subr.mxu0 0.0
        %818 = vmatpush1.msra.mxu0 0.0
        %819 = vmatprep.subr.mxu0 0.0
        %820 = vmatpush1.msra.mxu0 0.0
        %821 = vmatprep.subr.mxu0 0.0
        %822 = vmatpush1.msra.mxu0 0.0
        %823 = vmatprep.subr.mxu0 0.0
        %824 = vmatpush1.msra.mxu0 0.0
        %825 = vmatprep.subr.mxu0 0.0
        %826 = vmatpush1.msra.mxu0 0.0
        %827 = vmatprep.subr.mxu0 0.0
        %828 = vmatpush1.msra.mxu0 0.0
        %829 = vmatprep.subr.mxu0 0.0
        %830 = vmatpush1.msra.mxu0 0.0
        %831 = vmatprep.subr.mxu0 0.0
        %832 = vmatpush1.msra.mxu0 0.0
        %833 = vmatprep.mubr.f32.mxu0 0.0
        %834 = vmatmul.mubr.f32.gmra.mrb[0].mxu0 %v767
        %v835 = vpop.f32.mrb[0].mxu0
        %v836 = vadd.f32 0.0, %v835
        %v837 = vpop.f32.mrb[0].mxu0
        %838 = vdwg.mxu0
        %840 = vrot.lane.b32.xlu0 %v836, 16
        %v841 = vpop.permute.xlu0 %840
        %vm843 = vcmask 195712
        %844 = vst.msk [vmem:[#allocation3] sm:$0xff] %vm843, %v841
        %v845 = vld [vmem:[#allocation2] sm:$0xff]
        %847 = vrot.lane.b32.xlu0 %v845, 104
        %v848 = vpop.permute.xlu0 %847
        %849 = vrot.lane.b32.xlu0 %v845, 72
        %v850 = vpop.permute.xlu0 %849
        %v851 = vsel %vm331, %v848, 0
        %v853 = vsel %vm331, %v850, 0
        %855 = vmatprep.subr.mxu0 0.0
        %856 = vmatpush1.xpose.msra.mxu0 %v853
        %857 = vmatprep.subr.mxu0 0.0
        %858 = vmatpush1.xpose.msra.mxu0 0.0
        %859 = vmatprep.subr.mxu0 0.0
        %860 = vmatpush1.xpose.msra.mxu0 0.0
        %861 = vmatprep.subr.mxu0 0.0
        %862 = vmatpush1.xpose.msra.mxu0 0.0
        %863 = vmatprep.subr.mxu0 0.0
        %864 = vmatpush1.xpose.msra.mxu0 0.0
        %865 = vmatprep.subr.mxu0 0.0
        %866 = vmatpush1.xpose.msra.mxu0 0.0
        %867 = vmatprep.subr.mxu0 0.0
        %868 = vmatpush1.xpose.msra.mxu0 0.0
        %869 = vmatprep.subr.mxu0 0.0
        %870 = vmatpush1.xpose.msra.mxu0 0.0
        %871 = vmatprep.subr.mxu0 0.0
        %872 = vmatpush1.xpose.msra.mxu0 0.0
        %873 = vmatprep.subr.mxu0 0.0
        %874 = vmatpush1.xpose.msra.mxu0 0.0
        %875 = vmatprep.subr.mxu0 0.0
        %876 = vmatpush1.xpose.msra.mxu0 0.0
        %877 = vmatprep.subr.mxu0 0.0
        %878 = vmatpush1.xpose.msra.mxu0 0.0
        %879 = vmatprep.subr.mxu0 0.0
        %880 = vmatpush1.xpose.msra.mxu0 0.0
        %881 = vmatprep.subr.mxu0 0.0
        %882 = vmatpush1.xpose.msra.mxu0 0.0
        %883 = vmatprep.subr.mxu0 0.0
        %884 = vmatpush1.xpose.msra.mxu0 0.0
        %885 = vmatprep.subr.mxu0 0.0
        %886 = vmatpush1.xpose.msra.mxu0 0.0
        %887 = vmatprep.subr.mxu0 0.0
        %888 = vmatpush1.xpose.msra.mxu0 0.0
        %889 = vmatprep.subr.mxu0 0.0
        %890 = vmatpush1.xpose.msra.mxu0 0.0
        %891 = vmatprep.subr.mxu0 0.0
        %892 = vmatpush1.xpose.msra.mxu0 0.0
        %893 = vmatprep.subr.mxu0 0.0
        %894 = vmatpush1.xpose.msra.mxu0 0.0
        %895 = vmatprep.subr.mxu0 0.0
        %896 = vmatpush1.xpose.msra.mxu0 0.0
        %897 = vmatprep.subr.mxu0 0.0
        %898 = vmatpush1.xpose.msra.mxu0 0.0
        %899 = vmatprep.subr.mxu0 0.0
        %900 = vmatpush1.xpose.msra.mxu0 0.0
        %901 = vmatprep.subr.mxu0 0.0
        %902 = vmatpush1.xpose.msra.mxu0 0.0
        %903 = vmatprep.subr.mxu0 0.0
        %904 = vmatpush1.xpose.msra.mxu0 0.0
        %905 = vmatprep.subr.mxu0 0.0
        %906 = vmatpush1.xpose.msra.mxu0 0.0
        %907 = vmatprep.subr.mxu0 0.0
        %908 = vmatpush1.xpose.msra.mxu0 0.0
        %909 = vmatprep.subr.mxu0 0.0
        %910 = vmatpush1.xpose.msra.mxu0 0.0
        %911 = vmatprep.subr.mxu0 0.0
        %912 = vmatpush1.xpose.msra.mxu0 0.0
        %913 = vmatprep.subr.mxu0 0.0
        %914 = vmatpush1.xpose.msra.mxu0 0.0
        %915 = vmatprep.subr.mxu0 0.0
        %916 = vmatpush1.xpose.msra.mxu0 0.0
        %917 = vmatprep.subr.mxu0 0.0
        %918 = vmatpush1.xpose.msra.mxu0 0.0
        %919 = vmatprep.mubr.f32.mxu0 0.0
        %920 = vmatmul.mubr.f32.gmra.mrb[0].mxu0 %v851
        %v921 = vpop.f32.mrb[0].mxu0
        %v922 = vadd.f32 0.0, %v921
        %v923 = vpop.f32.mrb[0].mxu0
        %924 = vdwg.mxu0
        %v925 = vsel %vm331, %v922, -inf
        %926 = vmax.xlane.f32.xlu0 %v925
        %v927 = vpop.xlane.xlu0 %926
        %v928 = vsub.f32 %v922, %v927
        %v929 = vmul.f32 %v928, 1.442695
        %v930 = vpow.pop %v929
        %v931 = vsel %vm331, %v930, 0.0
        %932 = vadd.xlane.f32.xlu0 %v931
        %v933 = vpop.xlane.xlu0 %932
        %v934 = vrcp.pop %v933
        %v935 = vmul.f32 %v930, %v934
        %s936 = scalar_lea.vmem %s238, 24 [#allocation10]
        %937 = vst.msk [vmem:[%s936] sm:$0xff] %vm331, %v935
        %938 = vrot.lane.b32.xlu0 %v845, 40
        %v939 = vpop.permute.xlu0 %938
        %v942 = vsel %vm331, %v935, 0
        %944 = vmatprep.subr.mxu0 0.0
        %945 = vmatpush1.msra.mxu0 %v939
        %946 = vmatprep.subr.mxu0 0.0
        %947 = vmatpush1.msra.mxu0 0.0
        %948 = vmatprep.subr.mxu0 0.0
        %949 = vmatpush1.msra.mxu0 0.0
        %950 = vmatprep.subr.mxu0 0.0
        %951 = vmatpush1.msra.mxu0 0.0
        %952 = vmatprep.subr.mxu0 0.0
        %953 = vmatpush1.msra.mxu0 0.0
        %954 = vmatprep.subr.mxu0 0.0
        %955 = vmatpush1.msra.mxu0 0.0
        %956 = vmatprep.subr.mxu0 0.0
        %957 = vmatpush1.msra.mxu0 0.0
        %958 = vmatprep.subr.mxu0 0.0
        %959 = vmatpush1.msra.mxu0 0.0
        %960 = vmatprep.subr.mxu0 0.0
        %961 = vmatpush1.msra.mxu0 0.0
        %962 = vmatprep.subr.mxu0 0.0
        %963 = vmatpush1.msra.mxu0 0.0
        %964 = vmatprep.subr.mxu0 0.0
        %965 = vmatpush1.msra.mxu0 0.0
        %966 = vmatprep.subr.mxu0 0.0
        %967 = vmatpush1.msra.mxu0 0.0
        %968 = vmatprep.subr.mxu0 0.0
        %969 = vmatpush1.msra.mxu0 0.0
        %970 = vmatprep.subr.mxu0 0.0
        %971 = vmatpush1.msra.mxu0 0.0
        %972 = vmatprep.subr.mxu0 0.0
        %973 = vmatpush1.msra.mxu0 0.0
        %974 = vmatprep.subr.mxu0 0.0
        %975 = vmatpush1.msra.mxu0 0.0
        %976 = vmatprep.subr.mxu0 0.0
        %977 = vmatpush1.msra.mxu0 0.0
        %978 = vmatprep.subr.mxu0 0.0
        %979 = vmatpush1.msra.mxu0 0.0
        %980 = vmatprep.subr.mxu0 0.0
        %981 = vmatpush1.msra.mxu0 0.0
        %982 = vmatprep.subr.mxu0 0.0
        %983 = vmatpush1.msra.mxu0 0.0
        %984 = vmatprep.subr.mxu0 0.0
        %985 = vmatpush1.msra.mxu0 0.0
        %986 = vmatprep.subr.mxu0 0.0
        %987 = vmatpush1.msra.mxu0 0.0
        %988 = vmatprep.subr.mxu0 0.0
        %989 = vmatpush1.msra.mxu0 0.0
        %990 = vmatprep.subr.mxu0 0.0
        %991 = vmatpush1.msra.mxu0 0.0
        %992 = vmatprep.subr.mxu0 0.0
        %993 = vmatpush1.msra.mxu0 0.0
        %994 = vmatprep.subr.mxu0 0.0
        %995 = vmatpush1.msra.mxu0 0.0
        %996 = vmatprep.subr.mxu0 0.0
        %997 = vmatpush1.msra.mxu0 0.0
        %998 = vmatprep.subr.mxu0 0.0
        %999 = vmatpush1.msra.mxu0 0.0
        %1000 = vmatprep.subr.mxu0 0.0
        %1001 = vmatpush1.msra.mxu0 0.0
        %1002 = vmatprep.subr.mxu0 0.0
        %1003 = vmatpush1.msra.mxu0 0.0
        %1004 = vmatprep.subr.mxu0 0.0
        %1005 = vmatpush1.msra.mxu0 0.0
        %1006 = vmatprep.subr.mxu0 0.0
        %1007 = vmatpush1.msra.mxu0 0.0
        %1008 = vmatprep.mubr.f32.mxu0 0.0
        %1009 = vmatmul.mubr.f32.gmra.mrb[0].mxu0 %v942
        %v1010 = vpop.f32.mrb[0].mxu0
        %v1011 = vadd.f32 0.0, %v1010
        %v1012 = vpop.f32.mrb[0].mxu0
        %1013 = vdwg.mxu0
        %1015 = vrot.lane.b32.xlu0 %v1011, 24
        %v1016 = vpop.permute.xlu0 %1015
        %vm1018 = vcmask 261312
        %1019 = vst.msk [vmem:[#allocation3] sm:$0xff] %vm1018, %v1016
        %v1020 = vld [vmem:[#allocation3] sm:$0xff]
        %1021 = vst.msk [vmem:[%s231] sm:$0xff] %vm251, %v1020
        %s1022 = sand.u32 %s102, 1
        %s1023 = scalar_lea.sflag [#allocation6], %s1022
        %s1024 = sand.u32 %s102, 1
        %s1025 = smul.addr %s1024, 8
        %s1026 = scalar_lea.vmem [#allocation9], %s1025
        %s1027 = sand.u32 %s128, 1
        %s1028 = scalar_lea.sflag [#allocation11], %s1027
        %s1029 = sand.u32 %s128, 1
        %s1030 = smul.addr %s1029, 32
        %s1031 = scalar_lea.vmem [#allocation10], %s1030
        // Predicated region
        $region41: #{tpu_custom_call.1} parent=31 // pred_check
          %p1032 = pneg %p112
        $region42: #{tpu_custom_call.1} parent=31 // pred_check_branch
          %1034 = sbr.rel (%p1032) target = $region44
        $region43: #{tpu_custom_call.1} parent=31 // pred_region
          %s1036 = ssub.s32 128, 128
          %1037 = vsyncadd %s1023, %s1036
          %s1038 = smul.addr %s26, 128
          %s1039 = scalar_lea.hbm %s3, %s1038
          %s1041 = sshll.u32 %s1026, 4
          %s1042 = int_to_ptr.vmem [resolvable:$true] %s1041
          %1044 = dma.vmem_to_hbm [thread:$0]  %s1042, 128, %s1039, %s1023
        $region44: #{tpu_custom_call.1} parent=31 // pred_fallthru
          _
        // Predicated region
        $region45: #{tpu_custom_call.1} parent=31 // pred_check
          %p1045 = pneg %p138
        $region46: #{tpu_custom_call.1} parent=31 // pred_check_branch
          %1047 = sbr.rel (%p1045) target = $region48
        $region47: #{tpu_custom_call.1} parent=31 // pred_region
          %s1049 = ssub.s32 512, 512
          %1050 = vsyncadd %s1028, %s1049
          %s1051 = smul.addr %s26, 4
          %s1052 = smul.addr %s1051, 128
          %s1053 = scalar_lea.hbm %s4, %s1052
          %s1054 = sshll.u32 %s1031, 4
          %s1055 = int_to_ptr.vmem [resolvable:$true] %s1054
          %1060 = dma.vmem_to_hbm [thread:$0]  %s1055, 512, %s1053, %s1028, 128, 128, 8
        $region48: #{tpu_custom_call.1} parent=31 // pred_fallthru
          _
      $region32: #{tpu_custom_call.1} parent=5 // pred_fallthru
        _
      %p1061 = scmp.le.s32.totalorder 2, %s21
      // Predicated region
      $region49: #{tpu_custom_call.1} parent=5 // pred_check
        %p1062 = pneg %p1061
      $region50: #{tpu_custom_call.1} parent=5 // pred_check_branch
        %1064 = sbr.rel (%p1062) target = $region52
      $region51: #{tpu_custom_call.1} parent=5 // pred_region
        %s1065 = ssub.s32 %s21, 2
        // Predicated region
        $region53: #{tpu_custom_call.1} parent=51 // pred_check
          %p1066 = pneg %p118
        $region54: #{tpu_custom_call.1} parent=51 // pred_check_branch
          %1068 = sbr.rel (%p1066) target = $region56
        $region55: #{tpu_custom_call.1} parent=51 // pred_region
          %s1069 = sand.u32 %s103, 1
          %s1070 = scalar_lea.sflag [#allocation6], %s1069
          %s1071 = sand.u32 %s103, 1
          %s1072 = smul.addr %s1071, 8
          %s1073 = scalar_lea.vmem [#allocation9], %s1072
          %1074 = dma.done %s1070, 128
        $region56: #{tpu_custom_call.1} parent=51 // pred_fallthru
          _
        // Predicated region
        $region57: #{tpu_custom_call.1} parent=51 // pred_check
          %p1075 = pneg %p144
        $region58: #{tpu_custom_call.1} parent=51 // pred_check_branch
          %1077 = sbr.rel (%p1075) target = $region60
        $region59: #{tpu_custom_call.1} parent=51 // pred_region
          %s1078 = sand.u32 %s129, 1
          %s1079 = scalar_lea.sflag [#allocation11], %s1078
          %s1080 = sand.u32 %s129, 1
          %s1081 = smul.addr %s1080, 32
          %s1082 = scalar_lea.vmem [#allocation10], %s1081
          %1083 = dma.done %s1079, 512
        $region60: #{tpu_custom_call.1} parent=51 // pred_fallthru
          _
      $region52: #{tpu_custom_call.1} parent=5 // pred_fallthru
        _
    $region6: #{tpu_custom_call.1} parent=1 // loop_footer
      %s25 = sadd.s32 1, %s21
    $region7: #{tpu_custom_call.1} parent=1 // loop_footer_branch
      %20 = sbr.rel target = $region3
    $region8: #{tpu_custom_call.1} parent=1 // loop_exit
      _
    %1084 = vsyncpa [#allocation5], 1
    %s1085 = scalar_lea.sflag [#allocation5], 1
    %1086 = vsyncpa %s1085, 1
    %1087 = vsyncpa [#allocation8], 1
    %1088 = vsyncpa [#allocation6], 1
    %s1089 = scalar_lea.sflag [#allocation6], 1
    %1090 = vsyncpa %s1089, 1
    %1091 = vsyncpa [#allocation11], 1
    %s1092 = scalar_lea.sflag [#allocation11], 1
    %1093 = vsyncpa %s1092, 1

</llo_original>
